<compile_context>
chip_gen: v5e
topology: v5e:2x2
jax: 0.10.0
libtpu: 0.0.40
codegen_flags: <defaults>
</compile_context>

<pallas_src>
import jax
import jax.numpy as jnp
from jax.experimental import pallas as pl
from jax.experimental.pallas import tpu as pltpu


def _round_up(x, m):
    return ((x + m - 1) // m) * m


def gae_kernel(x_ref,
               w1_ref, b1_ref,   # encoder layer 1: input_dim -> hidden_dim
               w2_ref, b2_ref,   # encoder layer 2: hidden_dim -> embedding_dim
               w3_ref, b3_ref,   # decoder layer 1: embedding_dim -> hidden_dim
               w4_ref, b4_ref,   # decoder layer 2: hidden_dim -> input_dim
               emb_ref, rec_ref):
    # encoder: Linear -> ReLU -> Linear   (bf16 MXU operands, f32 accumulation)
    x = x_ref[...].astype(jnp.bfloat16)                       # cast in-kernel
    h1 = jnp.dot(x, w1_ref[...],
                 preferred_element_type=jnp.float32) + b1_ref[...]
    h1 = jnp.maximum(h1, 0.0).astype(jnp.bfloat16)
    emb = jnp.dot(h1, w2_ref[...],
                  preferred_element_type=jnp.float32) + b2_ref[...]

    # decoder: Linear -> ReLU -> Linear
    h2 = jnp.dot(emb.astype(jnp.bfloat16), w3_ref[...],
                 preferred_element_type=jnp.float32) + b3_ref[...]
    h2 = jnp.maximum(h2, 0.0).astype(jnp.bfloat16)
    rec = jnp.dot(h2, w4_ref[...],
                  preferred_element_type=jnp.float32) + b4_ref[...]

    emb_ref[...] = emb.astype(emb_ref.dtype)
    rec_ref[...] = rec.astype(rec_ref.dtype)


def _vmem_budget_bytes():
    """~75% of physical per-core VMEM (96 MiB on v5e/v6e, 48 MiB on v7x)."""
    try:
        cap = pltpu.get_tpu_info().vmem_capacity_bytes
    except Exception:
        cap = 64 * 1024 * 1024        # conservative fallback (v7x-sized)
    return int(cap * 3 // 4)


def _pick_tile_rows(n, in_p, hid_p, emb_p, x_bytes, emb_bytes, rec_bytes,
                    vmem_budget):
    n_p0 = _round_up(n, 128)
    # resident (single-buffered, Buffered(1)) bf16 weights + f32 biases
    weight_bytes = 2 * (in_p * hid_p + hid_p * emb_p + emb_p * hid_p + hid_p * in_p)
    bias_bytes = 4 * (hid_p + emb_p + hid_p + in_p)
    # per-row footprint: double-buffered x/emb/rec tiles + f32 intermediates
    per_row = (2 * (in_p * x_bytes + emb_p * emb_bytes + in_p * rec_bytes)
               + 4 * (2 * hid_p + emb_p + in_p))
    avail = vmem_budget - weight_bytes - bias_bytes
    if avail < 128 * per_row:
        # TODO(synk): for very large input_dim (adjacency n), add a second grid
        # axis tiling in_p (contraction tiles for layer 1, output-column tiles
        # for layer 4, with accumulator scratch) instead of keeping all four
        # weights VMEM-resident.
        raise ValueError(
            f"GAE kernel does not fit VMEM budget ({vmem_budget} B): resident "
            f"weights need {weight_bytes + bias_bytes} B and a minimal 128-row "
            f"tile needs {128 * per_row} B more.")
    vmem_rows = (avail // per_row) // 128 * 128           # biggest tile that fits
    depth_rows = max(128, (n_p0 // 6) // 128 * 128)       # >=6 steps (>=3/core on v7x)
    tile_rows = int(max(128, min(vmem_rows, depth_rows, n_p0)))
    if tile_rows >= 256:
        tile_rows = tile_rows // 256 * 256                # full MXU LHS passes
    return tile_rows


def gae_forward(adj_matrix, params, *, tile_rows=None,
                emb_dtype=jnp.float32, rec_dtype=jnp.float32):
    """params = dict with w1..w4 (stored (in, out)) and b1..b4 (stored (1, out))."""
    n, input_dim = adj_matrix.shape
    hidden_dim = params["w1"].shape[1]
    embedding_dim = params["w2"].shape[1]

    # lane-dense padded feature dims
    in_p = _round_up(input_dim, 128)
    hid_p = _round_up(hidden_dim, 128)
    emb_p = _round_up(embedding_dim, 128)

    x_bytes = jnp.dtype(adj_matrix.dtype).itemsize
    emb_bytes = jnp.dtype(emb_dtype).itemsize
    rec_bytes = jnp.dtype(rec_dtype).itemsize

    vmem_budget = _vmem_budget_bytes()
    if tile_rows is None:
        tile_rows = _pick_tile_rows(n, in_p, hid_p, emb_p,
                                    x_bytes, emb_bytes, rec_bytes, vmem_budget)
    n_p = _round_up(n, tile_rows)
    grid = (n_p // tile_rows,)

    def maybe_pad2(a, rows, cols, dtype=None):
        # only materialize a copy when a pad / cast is actually needed
        if dtype is not None and a.dtype != dtype:
            a = a.astype(dtype)
        pr, pc = rows - a.shape[0], cols - a.shape[1]
        if pr or pc:
            a = jnp.pad(a, ((0, pr), (0, pc)))
        return a

    # zero padding keeps the math exact (padded columns stay 0 through ReLU).
    # x keeps its native dtype (bf16 cast happens in-kernel) and is only copied
    # if its shape is not already tile-aligned.
    x_p = maybe_pad2(adj_matrix, n_p, in_p)
    w1 = maybe_pad2(params["w1"], in_p, hid_p, jnp.bfloat16)
    w2 = maybe_pad2(params["w2"], hid_p, emb_p, jnp.bfloat16)
    w3 = maybe_pad2(params["w3"], emb_p, hid_p, jnp.bfloat16)
    w4 = maybe_pad2(params["w4"], hid_p, in_p, jnp.bfloat16)
    b1 = maybe_pad2(params["b1"], 1, hid_p, jnp.float32)
    b2 = maybe_pad2(params["b2"], 1, emb_p, jnp.float32)
    b3 = maybe_pad2(params["b3"], 1, hid_p, jnp.float32)
    b4 = maybe_pad2(params["b4"], 1, in_p, jnp.float32)

    def row_spec(cols):
        return pl.BlockSpec((tile_rows, cols), lambda i: (i, 0))

    def resident_spec(shape):
        # constant block index -> fetched once; single-buffer to halve its VMEM
        return pl.BlockSpec(shape, lambda i: (0, 0),
                            pipeline_mode=pl.Buffered(1))

    in_specs = [
        row_spec(in_p),
        resident_spec(w1.shape), resident_spec(b1.shape),
        resident_spec(w2.shape), resident_spec(b2.shape),
        resident_spec(w3.shape), resident_spec(b3.shape),
        resident_spec(w4.shape), resident_spec(b4.shape),
    ]
    out_specs = (row_spec(emb_p), row_spec(in_p))
    out_shapes = (
        jax.ShapeDtypeStruct((n_p, emb_p), emb_dtype),   # embedding
        jax.ShapeDtypeStruct((n_p, in_p), rec_dtype),    # adj_hat
    )

    flops = 2 * n_p * (in_p * hid_p + hid_p * emb_p + emb_p * hid_p + hid_p * in_p)
    bytes_accessed = (
        n_p * in_p * x_bytes
        + (w1.size + w2.size + w3.size + w4.size) * 2
        + (b1.size + b2.size + b3.size + b4.size) * 4
        + n_p * emb_p * emb_bytes + n_p * in_p * rec_bytes
    )

    emb_pad, rec_pad = pl.pallas_call(
        gae_kernel,
        out_shape=out_shapes,
        grid=grid,
        in_specs=in_specs,
        out_specs=out_specs,
        compiler_params=pltpu.CompilerParams(
            dimension_semantics=("parallel",),
            vmem_limit_bytes=int(vmem_budget),
        ),
        cost_estimate=pl.CostEstimate(
            flops=flops, transcendentals=0, bytes_accessed=bytes_accessed),
    )(x_p, w1, b1, w2, b2, w3, b3, w4, b4)

    # slice back to the logical (unpadded) shapes
    return emb_pad[:n, :embedding_dim], rec_pad[:n, :input_dim]


def init_params(key, input_dim, hidden_dim, embedding_dim):
    ks = jax.random.split(key, 8)

    def lin(kw, kb, fan_in, fan_out):
        bound = 1.0 / jnp.sqrt(fan_in)
        # weight stored (in, out) so kernel does x @ w
        w = jax.random.uniform(kw, (fan_in, fan_out), jnp.float32, -bound, bound)
        b = jax.random.uniform(kb, (1, fan_out), jnp.float32, -bound, bound)
        return w, b

    w1, b1 = lin(ks[0], ks[1], input_dim, hidden_dim)
    w2, b2 = lin(ks[2], ks[3], hidden_dim, embedding_dim)
    w3, b3 = lin(ks[4], ks[5], embedding_dim, hidden_dim)
    w4, b4 = lin(ks[6], ks[7], hidden_dim, input_dim)
    return dict(w1=w1, b1=b1, w2=w2, b2=b2, w3=w3, b3=b3, w4=w4, b4=b4)


def gae_reference_f32(adj, p):
    h1 = jnp.maximum(adj @ p["w1"] + p["b1"], 0.0)
    emb = h1 @ p["w2"] + p["b2"]
    h2 = jnp.maximum(emb @ p["w3"] + p["b3"], 0.0)
    rec = h2 @ p["w4"] + p["b4"]
    return emb, rec


def gae_reference_bf16(adj, p):
    bf = jnp.bfloat16
    x = adj.astype(bf)
    h1 = jnp.dot(x, p["w1"].astype(bf), preferred_element_type=jnp.float32) + p["b1"]
    h1 = jnp.maximum(h1, 0.0).astype(bf)
    emb = jnp.dot(h1, p["w2"].astype(bf), preferred_element_type=jnp.float32) + p["b2"]
    h2 = jnp.dot(emb.astype(bf), p["w3"].astype(bf),
                 preferred_element_type=jnp.float32) + p["b3"]
    h2 = jnp.maximum(h2, 0.0).astype(bf)
    rec = jnp.dot(h2, p["w4"].astype(bf), preferred_element_type=jnp.float32) + p["b4"]
    return emb, rec


if __name__ == "__main__":
    # adjacency matrix of a 512-node graph -> input_dim = 512 (lane/row aligned;
    # the tile heuristic gives tile_rows=128 -> grid=(4,), so the row pipeline
    # actually overlaps DMA with MXU work, incl. >=2 steps/core on v7x)
    N = 512
    input_dim = 512
    hidden_dim = 256
    embedding_dim = 128

    key = jax.random.PRNGKey(0)
    k_adj, k_params = jax.random.split(key)

    # symmetric 0/1 adjacency matrix (deterministic, exact in bf16)
    a = (jax.random.uniform(k_adj, (N, N)) > 0.5).astype(jnp.float32)
    adj = jnp.maximum(a, a.T)

    params = init_params(k_params, input_dim, hidden_dim, embedding_dim)

    # default: f32 outputs (matches the PyTorch module)
    emb, adj_hat = gae_forward(adj, params)
    emb, adj_hat = jax.block_until_ready((emb, adj_hat))

    assert emb.shape == (N, embedding_dim)
    assert adj_hat.shape == (N, input_dim)

    # tight check against a bf16-consistent JAX reference
    emb_b, rec_b = gae_reference_bf16(adj, params)
    assert jnp.allclose(emb, emb_b, atol=2e-3, rtol=2e-3), \
        f"emb mismatch vs bf16 ref: {jnp.max(jnp.abs(emb - emb_b))}"
    assert jnp.allclose(adj_hat, rec_b, atol=2e-3, rtol=2e-3), \
        f"rec mismatch vs bf16 ref: {jnp.max(jnp.abs(adj_hat - rec_b))}"

    # loose check against the full-f32 (PyTorch-semantics) reference
    emb_f, rec_f = gae_reference_f32(adj, params)
    assert jnp.allclose(emb, emb_f, atol=5e-2, rtol=5e-2), \
        f"emb mismatch vs f32 ref: {jnp.max(jnp.abs(emb - emb_f))}"
    assert jnp.allclose(adj_hat, rec_f, atol=5e-2, rtol=5e-2), \
        f"rec mismatch vs f32 ref: {jnp.max(jnp.abs(adj_hat - rec_f))}"

    # optional bandwidth optimization: bf16 reconstruction writeback (the
    # largest HBM stream); only the final rounding differs from the f32 path.
    _, adj_hat_bf16 = jax.block_until_ready(
        gae_forward(adj, params, rec_dtype=jnp.bfloat16))
    assert adj_hat_bf16.dtype == jnp.bfloat16
    assert jnp.allclose(adj_hat_bf16.astype(jnp.float32), rec_b,
                        atol=2e-2, rtol=2e-2), \
        f"bf16 rec mismatch: {jnp.max(jnp.abs(adj_hat_bf16.astype(jnp.float32) - rec_b))}"

    print("KERNEL_OK")
</pallas_src>

<mosaic_0001>
module attributes {stable_mosaic.version = 11 : i64} {
  func.func @gae_kernel(%arg0: i32, %arg1: memref<128x512xf32, #tpu.memory_space<vmem>>, %arg2: memref<512x256xbf16, #tpu.memory_space<vmem>>, %arg3: memref<1x256xf32, #tpu.memory_space<vmem>>, %arg4: memref<256x128xbf16, #tpu.memory_space<vmem>>, %arg5: memref<1x128xf32, #tpu.memory_space<vmem>>, %arg6: memref<128x256xbf16, #tpu.memory_space<vmem>>, %arg7: memref<1x256xf32, #tpu.memory_space<vmem>>, %arg8: memref<256x512xbf16, #tpu.memory_space<vmem>>, %arg9: memref<1x512xf32, #tpu.memory_space<vmem>>, %arg10: memref<128x128xf32, #tpu.memory_space<vmem>>, %arg11: memref<128x512xf32, #tpu.memory_space<vmem>>) attributes {dimension_semantics = [#tpu.dimension_semantics<parallel>], iteration_bounds = array<i64: 4>, scalar_prefetch = 0 : i64, scratch_operands = 0 : i64, tpu.core_type = #tpu.core_type<tc>, window_params = [{transform_indices = @transform_0, window_bounds = array<i64: 128, 512>}, {pipeline_mode = #tpu.pipeline_mode<synchronous>, transform_indices = @transform_1, window_bounds = array<i64: 512, 256>}, {pipeline_mode = #tpu.pipeline_mode<synchronous>, transform_indices = @transform_2, window_bounds = array<i64: 1, 256>}, {pipeline_mode = #tpu.pipeline_mode<synchronous>, transform_indices = @transform_3, window_bounds = array<i64: 256, 128>}, {pipeline_mode = #tpu.pipeline_mode<synchronous>, transform_indices = @transform_4, window_bounds = array<i64: 1, 128>}, {pipeline_mode = #tpu.pipeline_mode<synchronous>, transform_indices = @transform_5, window_bounds = array<i64: 128, 256>}, {pipeline_mode = #tpu.pipeline_mode<synchronous>, transform_indices = @transform_6, window_bounds = array<i64: 1, 256>}, {pipeline_mode = #tpu.pipeline_mode<synchronous>, transform_indices = @transform_7, window_bounds = array<i64: 256, 512>}, {pipeline_mode = #tpu.pipeline_mode<synchronous>, transform_indices = @transform_8, window_bounds = array<i64: 1, 512>}, {transform_indices = @transform_9, window_bounds = array<i64: 128, 128>}, {transform_indices = @transform_10, window_bounds = array<i64: 128, 512>}]} {
    %c0 = arith.constant 0 : index
    %c0_0 = arith.constant 0 : index
    %0 = vector.load %arg1[%c0, %c0_0] : memref<128x512xf32, #tpu.memory_space<vmem>>, vector<128x512xf32>
    %1 = arith.truncf %0 : vector<128x512xf32> to vector<128x512xbf16>
    %c0_1 = arith.constant 0 : index
    %c0_2 = arith.constant 0 : index
    %2 = vector.load %arg2[%c0_1, %c0_2] : memref<512x256xbf16, #tpu.memory_space<vmem>>, vector<512x256xbf16>
    %cst = arith.constant dense<0.000000e+00> : vector<128x256xf32>
    %3 = tpu.matmul %1, %2, %cst {dimension_numbers = #tpu.dot_dimension_numbers<[1], [0], [0], [1], [0, 0, 1, 1], [], []>} : vector<128x512xbf16>, vector<512x256xbf16>, vector<128x256xf32> -> vector<128x256xf32>
    %c0_3 = arith.constant 0 : index
    %c0_4 = arith.constant 0 : index
    %4 = vector.load %arg3[%c0_3, %c0_4] : memref<1x256xf32, #tpu.memory_space<vmem>>, vector<1x256xf32>
    %5 = vector.broadcast %4 : vector<1x256xf32> to vector<128x256xf32>
    %6 = arith.addf %3, %5 : vector<128x256xf32>
    %cst_5 = arith.constant 0.000000e+00 : f32
    %7 = vector.broadcast %cst_5 : f32 to vector<128x256xf32>
    %8 = arith.maximumf %6, %7 : vector<128x256xf32>
    %9 = arith.truncf %8 : vector<128x256xf32> to vector<128x256xbf16>
    %c0_6 = arith.constant 0 : index
    %c0_7 = arith.constant 0 : index
    %10 = vector.load %arg4[%c0_6, %c0_7] : memref<256x128xbf16, #tpu.memory_space<vmem>>, vector<256x128xbf16>
    %cst_8 = arith.constant dense<0.000000e+00> : vector<128x128xf32>
    %11 = tpu.matmul %9, %10, %cst_8 {dimension_numbers = #tpu.dot_dimension_numbers<[1], [0], [0], [1], [0, 0, 1, 1], [], []>} : vector<128x256xbf16>, vector<256x128xbf16>, vector<128x128xf32> -> vector<128x128xf32>
    %c0_9 = arith.constant 0 : index
    %c0_10 = arith.constant 0 : index
    %12 = vector.load %arg5[%c0_9, %c0_10] : memref<1x128xf32, #tpu.memory_space<vmem>>, vector<1x128xf32>
    %13 = vector.broadcast %12 : vector<1x128xf32> to vector<128x128xf32>
    %14 = arith.addf %11, %13 : vector<128x128xf32>
    %15 = arith.truncf %14 : vector<128x128xf32> to vector<128x128xbf16>
    %c0_11 = arith.constant 0 : index
    %c0_12 = arith.constant 0 : index
    %16 = vector.load %arg6[%c0_11, %c0_12] : memref<128x256xbf16, #tpu.memory_space<vmem>>, vector<128x256xbf16>
    %cst_13 = arith.constant dense<0.000000e+00> : vector<128x256xf32>
    %17 = tpu.matmul %15, %16, %cst_13 {dimension_numbers = #tpu.dot_dimension_numbers<[1], [0], [0], [1], [0, 0, 1, 1], [], []>} : vector<128x128xbf16>, vector<128x256xbf16>, vector<128x256xf32> -> vector<128x256xf32>
    %c0_14 = arith.constant 0 : index
    %c0_15 = arith.constant 0 : index
    %18 = vector.load %arg7[%c0_14, %c0_15] : memref<1x256xf32, #tpu.memory_space<vmem>>, vector<1x256xf32>
    %19 = vector.broadcast %18 : vector<1x256xf32> to vector<128x256xf32>
    %20 = arith.addf %17, %19 : vector<128x256xf32>
    %cst_16 = arith.constant 0.000000e+00 : f32
    %21 = vector.broadcast %cst_16 : f32 to vector<128x256xf32>
    %22 = arith.maximumf %20, %21 : vector<128x256xf32>
    %23 = arith.truncf %22 : vector<128x256xf32> to vector<128x256xbf16>
    %c0_17 = arith.constant 0 : index
    %c0_18 = arith.constant 0 : index
    %24 = vector.load %arg8[%c0_17, %c0_18] : memref<256x512xbf16, #tpu.memory_space<vmem>>, vector<256x512xbf16>
    %cst_19 = arith.constant dense<0.000000e+00> : vector<128x512xf32>
    %25 = tpu.matmul %23, %24, %cst_19 {dimension_numbers = #tpu.dot_dimension_numbers<[1], [0], [0], [1], [0, 0, 1, 1], [], []>} : vector<128x256xbf16>, vector<256x512xbf16>, vector<128x512xf32> -> vector<128x512xf32>
    %c0_20 = arith.constant 0 : index
    %c0_21 = arith.constant 0 : index
    %26 = vector.load %arg9[%c0_20, %c0_21] : memref<1x512xf32, #tpu.memory_space<vmem>>, vector<1x512xf32>
    %27 = vector.broadcast %26 : vector<1x512xf32> to vector<128x512xf32>
    %28 = arith.addf %25, %27 : vector<128x512xf32>
    %c0_22 = arith.constant 0 : index
    %c0_23 = arith.constant 0 : index
    %29 = vector.load %arg10[%c0_22, %c0_23] : memref<128x128xf32, #tpu.memory_space<vmem>>, vector<128x128xf32>
    tpu.vector_store %arg10[%c0_22, %c0_23], %14 {strides = array<i32>} : memref<128x128xf32, #tpu.memory_space<vmem>>, vector<128x128xf32>,
    %c0_24 = arith.constant 0 : index
    %c0_25 = arith.constant 0 : index
    %30 = vector.load %arg11[%c0_24, %c0_25] : memref<128x512xf32, #tpu.memory_space<vmem>>, vector<128x512xf32>
    tpu.vector_store %arg11[%c0_24, %c0_25], %28 {strides = array<i32>} : memref<128x512xf32, #tpu.memory_space<vmem>>, vector<128x512xf32>,
    return
  }
  func.func @transform_0(%arg0: i32) -> (i32, i32) {
    %c0_i32 = arith.constant 0 : i32
    %c0_i32_0 = arith.constant 0 : i32
    return %arg0, %c0_i32 : i32, i32
  }
  func.func @transform_1(%arg0: i32) -> (i32, i32) {
    %c0_i32 = arith.constant 0 : i32
    %c0_i32_0 = arith.constant 0 : i32
    %c0_i32_1 = arith.constant 0 : i32
    return %c0_i32, %c0_i32_0 : i32, i32
  }
  func.func @transform_2(%arg0: i32) -> (i32, i32) {
    %c0_i32 = arith.constant 0 : i32
    %c0_i32_0 = arith.constant 0 : i32
    %c0_i32_1 = arith.constant 0 : i32
    return %c0_i32, %c0_i32_0 : i32, i32
  }
  func.func @transform_3(%arg0: i32) -> (i32, i32) {
    %c0_i32 = arith.constant 0 : i32
    %c0_i32_0 = arith.constant 0 : i32
    %c0_i32_1 = arith.constant 0 : i32
    return %c0_i32, %c0_i32_0 : i32, i32
  }
  func.func @transform_4(%arg0: i32) -> (i32, i32) {
    %c0_i32 = arith.constant 0 : i32
    %c0_i32_0 = arith.constant 0 : i32
    %c0_i32_1 = arith.constant 0 : i32
    return %c0_i32, %c0_i32_0 : i32, i32
  }
  func.func @transform_5(%arg0: i32) -> (i32, i32) {
    %c0_i32 = arith.constant 0 : i32
    %c0_i32_0 = arith.constant 0 : i32
    %c0_i32_1 = arith.constant 0 : i32
    return %c0_i32, %c0_i32_0 : i32, i32
  }
  func.func @transform_6(%arg0: i32) -> (i32, i32) {
    %c0_i32 = arith.constant 0 : i32
    %c0_i32_0 = arith.constant 0 : i32
    %c0_i32_1 = arith.constant 0 : i32
    return %c0_i32, %c0_i32_0 : i32, i32
  }
  func.func @transform_7(%arg0: i32) -> (i32, i32) {
    %c0_i32 = arith.constant 0 : i32
    %c0_i32_0 = arith.constant 0 : i32
    %c0_i32_1 = arith.constant 0 : i32
    return %c0_i32, %c0_i32_0 : i32, i32
  }
  func.func @transform_8(%arg0: i32) -> (i32, i32) {
    %c0_i32 = arith.constant 0 : i32
    %c0_i32_0 = arith.constant 0 : i32
    %c0_i32_1 = arith.constant 0 : i32
    return %c0_i32, %c0_i32_0 : i32, i32
  }
  func.func @transform_9(%arg0: i32) -> (i32, i32) {
    %c0_i32 = arith.constant 0 : i32
    %c0_i32_0 = arith.constant 0 : i32
    return %arg0, %c0_i32 : i32, i32
  }
  func.func @transform_10(%arg0: i32) -> (i32, i32) {
    %c0_i32 = arith.constant 0 : i32
    %c0_i32_0 = arith.constant 0 : i32
    return %arg0, %c0_i32 : i32, i32
  }
}

</mosaic_0001>

<llo_original>
// kernel: tpu_custom_call.1
$region0: #{tpu_custom_call.1}
  #allocation0 [shape = 'u32[]', space=smem, size = 0x4, offset = 0x4, fixed_abs, tag = 'smem constant byte address 0x4 - core index']
  #allocation1 [shape = 'u32[72,128]{1,0:T(1,128)}', space=vmem, size = 0x9000, scoped, tag = 'internal scratch']
  %s0 = inlined_call_operand.hbm [shape: f32[512,512], index: 0, kind: input, shape index: {}]
  %s1 = inlined_call_operand.hbm [shape: bf16[512,256], index: 1, kind: input, shape index: {}]
  %s2 = inlined_call_operand.hbm [shape: f32[1,256], index: 2, kind: input, shape index: {}]
  %s3 = inlined_call_operand.hbm [shape: bf16[256,128], index: 3, kind: input, shape index: {}]
  %s4 = inlined_call_operand.vmem [shape: f32[1,128], index: 4, kind: input, shape index: {}]
  %s5 = inlined_call_operand.hbm [shape: bf16[128,256], index: 5, kind: input, shape index: {}]
  %s6 = inlined_call_operand.vmem [shape: f32[1,256], index: 6, kind: input, shape index: {}]
  %s7 = inlined_call_operand.hbm [shape: bf16[256,512], index: 7, kind: input, shape index: {}]
  %s8 = inlined_call_operand.vmem [shape: f32[1,512], index: 8, kind: input, shape index: {}]
  %s9 = inlined_call_operand.hbm [shape: f32[512,128], index: 9, kind: output, shape index: {0}]
  %s10 = inlined_call_operand.hbm [shape: f32[512,512], index: 10, kind: output, shape index: {1}]
  %11 = xla_tuple %s9, %s10
  %s12 = sld [smem:[#allocation0]]
  $region101: #{tpu_custom_call.1} parent=0
    _
  %s14 = ssub.s32 1, %s12
  %s15 = scalar_select 0, %s14, %s12
  $region1: #{tpu_custom_call.1} parent=0
    #allocation2 [shape = 'u8[524288]{0}', space=vmem, size = 0x80000, scoped, tag = 'input window, operand 0']
    #allocation3 [shape = 's32[2]{0}', space=sflag, size = 0x8, scoped, tag = 'scoped memory for tpu_custom_call.1']
    #allocation4 [shape = 's32[2]{0}', space=sflag, size = 0x8, scoped, tag = 'scoped memory for tpu_custom_call.1']
    #allocation5 [shape = 'u8[262144]{0}', space=vmem, size = 0x40000, scoped, tag = 'input window, operand 1, single buffered']
    #allocation6 [shape = 's32[1]{0}', space=sflag, size = 0x4, scoped, tag = 'scoped memory for tpu_custom_call.1']
    #allocation7 [shape = 'u8[1024]{0}', space=vmem, size = 0x400, scoped, tag = 'input window, operand 2, single buffered']
    #allocation8 [shape = 'u8[65536]{0}', space=vmem, size = 0x10000, scoped, tag = 'input window, operand 3, single buffered']
    #allocation9 [shape = 's32[1]{0}', space=sflag, size = 0x4, scoped, tag = 'scoped memory for tpu_custom_call.1']
    #allocation10 [shape = 'u8[65536]{0}', space=vmem, size = 0x10000, scoped, tag = 'input window, operand 5, single buffered']
    #allocation11 [shape = 'u8[262144]{0}', space=vmem, size = 0x40000, scoped, tag = 'input window, operand 7, single buffered']
    #allocation12 [shape = 's32[1]{0}', space=sflag, size = 0x4, scoped, tag = 'scoped memory for tpu_custom_call.1']
    #allocation13 [shape = 'u8[131072]{0}', space=vmem, size = 0x20000, scoped, tag = 'output window, operand 0']
    #allocation14 [shape = 'u8[524288]{0}', space=vmem, size = 0x80000, scoped, tag = 'output window, operand 1']
    #allocation15 [shape = 's32[2]{0}', space=sflag, size = 0x8, scoped, tag = 'scoped memory for tpu_custom_call.1']
    %16 = vsyncpa [#allocation3], 0
    %s17 = scalar_lea.sflag [#allocation3], 1
    %18 = vsyncpa %s17, 0
    %19 = vsyncpa [#allocation6], 0
    %20 = vsyncpa [#allocation9], 0
    %21 = vsyncpa [#allocation12], 0
    %22 = vsyncpa [#allocation4], 0
    %s23 = scalar_lea.sflag [#allocation4], 1
    %24 = vsyncpa %s23, 0
    %25 = vsyncpa [#allocation15], 0
    %s26 = scalar_lea.sflag [#allocation15], 1
    %27 = vsyncpa %s26, 0
    loop: start=0, step=1, limit=6
    $region2: #{tpu_custom_call.1} parent=1 // loop_pre_header
      _
    $region3: #{tpu_custom_call.1} parent=1 // loop_header
      %s29 = sphi 0, %s33
      %p30 = scmp.ge.s32.totalorder %s29, 6
      %s39 = sphi 0, %s41
      %s42 = sphi 0, %s39
      %s43 = sphi 0, %s42
      %s59 = sphi 0, %s43
      %s63 = sphi 0, %s63
      %s65 = sphi 0, %s63
      %s66 = sphi 0, %s65
      %s80 = sphi 0, %s66
      %s84 = sphi 0, %s84
      %s86 = sphi 0, %s84
      %s87 = sphi 0, %s86
      %s101 = sphi 0, %s87
      %s105 = sphi 0, %s105
      %s107 = sphi 0, %s105
      %s108 = sphi 0, %s107
      %s122 = sphi 0, %s108
      %s126 = sphi 0, %s126
      %s128 = sphi 0, %s126
      %s129 = sphi 0, %s128
      %s143 = sphi 0, %s129
      %s147 = sphi 0, %s147
      %s149 = sphi 0, %s147
      %s150 = sphi 0, %s149
      %s164 = sphi 0, %s150
      %s168 = sphi 0, %s168
      %s170 = sphi 0, %s168
      %s171 = sphi 0, %s170
      %s185 = sphi 0, %s171
      %s189 = sphi 0, %s189
      %s191 = sphi 0, %s189
      %s192 = sphi 0, %s191
      %s206 = sphi 0, %s192
      %s210 = sphi 0, %s210
      %s212 = sphi 0, %s210
      %s213 = sphi 0, %s212
      %s227 = sphi 0, %s213
      %s233 = sphi 0, %s235
      %s236 = sphi 0, %s233
      %s237 = sphi 0, %s236
      %s253 = sphi 0, %s237
      %s259 = sphi 0, %s261
      %s262 = sphi 0, %s259
      %s263 = sphi 0, %s262
      %s279 = sphi 0, %s263
    $region4: #{tpu_custom_call.1} parent=1 // loop_header_branch
      %32 = sbr.rel (%p30) target = $region8
    $region5: #{tpu_custom_call.1} parent=1 // loop_body
      %s34 = ssub.s32 %s29, 1
      %s35 = ssub.s32 %s29, 2
      %s36 = sadd.s32 %s29, 1
      %s37 = ssub.s32 %s29, %s36
      %p38 = scmp.eq.s32.totalorder %s37, 0
      %s40 = sadd.s32 %s39, 1
      %s41 = scalar_select %p38, %s39, %s40
      %p44 = pneg %p38
      %p45 = scmp.eq.s32.totalorder %s29, 3
      %p46 = por %p44, %p45
      %p47 = scmp.ne.s32.totalorder %s39, %s42
      %p48 = scmp.eq.s32.totalorder %s29, 0
      %p49 = por %p47, %p48
      %p50 = scmp.ne.s32.totalorder %s39, %s42
      %p51 = scmp.eq.s32.totalorder %s34, 3
      %p52 = por %p50, %p51
      %p53 = scmp.ne.s32.totalorder %s42, %s43
      %p54 = scmp.eq.s32.totalorder %s34, 0
      %p55 = por %p53, %p54
      %p56 = scmp.ne.s32.totalorder %s42, %s43
      %p57 = scmp.eq.s32.totalorder %s35, 3
      %p58 = por %p56, %p57
      %p60 = scmp.ne.s32.totalorder %s43, %s59
      %p61 = scmp.eq.s32.totalorder %s35, 0
      %p62 = por %p60, %p61
      %s64 = sadd.s32 %s63, 1
      %p67 = scmp.eq.s32.totalorder %s29, 3
      %p68 = scmp.ne.s32.totalorder %s63, %s65
      %p69 = scmp.eq.s32.totalorder %s29, 0
      %p70 = por %p68, %p69
      %p71 = scmp.ne.s32.totalorder %s63, %s65
      %p72 = scmp.eq.s32.totalorder %s34, 3
      %p73 = por %p71, %p72
      %p74 = scmp.ne.s32.totalorder %s65, %s66
      %p75 = scmp.eq.s32.totalorder %s34, 0
      %p76 = por %p74, %p75
      %p77 = scmp.ne.s32.totalorder %s65, %s66
      %p78 = scmp.eq.s32.totalorder %s35, 3
      %p79 = por %p77, %p78
      %p81 = scmp.ne.s32.totalorder %s66, %s80
      %p82 = scmp.eq.s32.totalorder %s35, 0
      %p83 = por %p81, %p82
      %s85 = sadd.s32 %s84, 1
      %p88 = scmp.eq.s32.totalorder %s29, 3
      %p89 = scmp.ne.s32.totalorder %s84, %s86
      %p90 = scmp.eq.s32.totalorder %s29, 0
      %p91 = por %p89, %p90
      %p92 = scmp.ne.s32.totalorder %s84, %s86
      %p93 = scmp.eq.s32.totalorder %s34, 3
      %p94 = por %p92, %p93
      %p95 = scmp.ne.s32.totalorder %s86, %s87
      %p96 = scmp.eq.s32.totalorder %s34, 0
      %p97 = por %p95, %p96
      %p98 = scmp.ne.s32.totalorder %s86, %s87
      %p99 = scmp.eq.s32.totalorder %s35, 3
      %p100 = por %p98, %p99
      %p102 = scmp.ne.s32.totalorder %s87, %s101
      %p103 = scmp.eq.s32.totalorder %s35, 0
      %p104 = por %p102, %p103
      %s106 = sadd.s32 %s105, 1
      %p109 = scmp.eq.s32.totalorder %s29, 3
      %p110 = scmp.ne.s32.totalorder %s105, %s107
      %p111 = scmp.eq.s32.totalorder %s29, 0
      %p112 = por %p110, %p111
      %p113 = scmp.ne.s32.totalorder %s105, %s107
      %p114 = scmp.eq.s32.totalorder %s34, 3
      %p115 = por %p113, %p114
      %p116 = scmp.ne.s32.totalorder %s107, %s108
      %p117 = scmp.eq.s32.totalorder %s34, 0
      %p118 = por %p116, %p117
      %p119 = scmp.ne.s32.totalorder %s107, %s108
      %p120 = scmp.eq.s32.totalorder %s35, 3
      %p121 = por %p119, %p120
      %p123 = scmp.ne.s32.totalorder %s108, %s122
      %p124 = scmp.eq.s32.totalorder %s35, 0
      %p125 = por %p123, %p124
      %s127 = sadd.s32 %s126, 1
      %p130 = scmp.eq.s32.totalorder %s29, 3
      %p131 = scmp.ne.s32.totalorder %s126, %s128
      %p132 = scmp.eq.s32.totalorder %s29, 0
      %p133 = por %p131, %p132
      %p134 = scmp.ne.s32.totalorder %s126, %s128
      %p135 = scmp.eq.s32.totalorder %s34, 3
      %p136 = por %p134, %p135
      %p137 = scmp.ne.s32.totalorder %s128, %s129
      %p138 = scmp.eq.s32.totalorder %s34, 0
      %p139 = por %p137, %p138
      %p140 = scmp.ne.s32.totalorder %s128, %s129
      %p141 = scmp.eq.s32.totalorder %s35, 3
      %p142 = por %p140, %p141
      %p144 = scmp.ne.s32.totalorder %s129, %s143
      %p145 = scmp.eq.s32.totalorder %s35, 0
      %p146 = por %p144, %p145
      %s148 = sadd.s32 %s147, 1
      %p151 = scmp.eq.s32.totalorder %s29, 3
      %p152 = scmp.ne.s32.totalorder %s147, %s149
      %p153 = scmp.eq.s32.totalorder %s29, 0
      %p154 = por %p152, %p153
      %p155 = scmp.ne.s32.totalorder %s147, %s149
      %p156 = scmp.eq.s32.totalorder %s34, 3
      %p157 = por %p155, %p156
      %p158 = scmp.ne.s32.totalorder %s149, %s150
      %p159 = scmp.eq.s32.totalorder %s34, 0
      %p160 = por %p158, %p159
      %p161 = scmp.ne.s32.totalorder %s149, %s150
      %p162 = scmp.eq.s32.totalorder %s35, 3
      %p163 = por %p161, %p162
      %p165 = scmp.ne.s32.totalorder %s150, %s164
      %p166 = scmp.eq.s32.totalorder %s35, 0
      %p167 = por %p165, %p166
      %s169 = sadd.s32 %s168, 1
      %p172 = scmp.eq.s32.totalorder %s29, 3
      %p173 = scmp.ne.s32.totalorder %s168, %s170
      %p174 = scmp.eq.s32.totalorder %s29, 0
      %p175 = por %p173, %p174
      %p176 = scmp.ne.s32.totalorder %s168, %s170
      %p177 = scmp.eq.s32.totalorder %s34, 3
      %p178 = por %p176, %p177
      %p179 = scmp.ne.s32.totalorder %s170, %s171
      %p180 = scmp.eq.s32.totalorder %s34, 0
      %p181 = por %p179, %p180
      %p182 = scmp.ne.s32.totalorder %s170, %s171
      %p183 = scmp.eq.s32.totalorder %s35, 3
      %p184 = por %p182, %p183
      %p186 = scmp.ne.s32.totalorder %s171, %s185
      %p187 = scmp.eq.s32.totalorder %s35, 0
      %p188 = por %p186, %p187
      %s190 = sadd.s32 %s189, 1
      %p193 = scmp.eq.s32.totalorder %s29, 3
      %p194 = scmp.ne.s32.totalorder %s189, %s191
      %p195 = scmp.eq.s32.totalorder %s29, 0
      %p196 = por %p194, %p195
      %p197 = scmp.ne.s32.totalorder %s189, %s191
      %p198 = scmp.eq.s32.totalorder %s34, 3
      %p199 = por %p197, %p198
      %p200 = scmp.ne.s32.totalorder %s191, %s192
      %p201 = scmp.eq.s32.totalorder %s34, 0
      %p202 = por %p200, %p201
      %p203 = scmp.ne.s32.totalorder %s191, %s192
      %p204 = scmp.eq.s32.totalorder %s35, 3
      %p205 = por %p203, %p204
      %p207 = scmp.ne.s32.totalorder %s192, %s206
      %p208 = scmp.eq.s32.totalorder %s35, 0
      %p209 = por %p207, %p208
      %s211 = sadd.s32 %s210, 1
      %p214 = scmp.eq.s32.totalorder %s29, 3
      %p215 = scmp.ne.s32.totalorder %s210, %s212
      %p216 = scmp.eq.s32.totalorder %s29, 0
      %p217 = por %p215, %p216
      %p218 = scmp.ne.s32.totalorder %s210, %s212
      %p219 = scmp.eq.s32.totalorder %s34, 3
      %p220 = por %p218, %p219
      %p221 = scmp.ne.s32.totalorder %s212, %s213
      %p222 = scmp.eq.s32.totalorder %s34, 0
      %p223 = por %p221, %p222
      %p224 = scmp.ne.s32.totalorder %s212, %s213
      %p225 = scmp.eq.s32.totalorder %s35, 3
      %p226 = por %p224, %p225
      %p228 = scmp.ne.s32.totalorder %s213, %s227
      %p229 = scmp.eq.s32.totalorder %s35, 0
      %p230 = por %p228, %p229
      %s231 = ssub.s32 %s29, %s36
      %p232 = scmp.eq.s32.totalorder %s231, 0
      %s234 = sadd.s32 %s233, 1
      %s235 = scalar_select %p232, %s233, %s234
      %p238 = pneg %p232
      %p239 = scmp.eq.s32.totalorder %s29, 3
      %p240 = por %p238, %p239
      %p241 = scmp.ne.s32.totalorder %s233, %s236
      %p242 = scmp.eq.s32.totalorder %s29, 0
      %p243 = por %p241, %p242
      %p244 = scmp.ne.s32.totalorder %s233, %s236
      %p245 = scmp.eq.s32.totalorder %s34, 3
      %p246 = por %p244, %p245
      %p247 = scmp.ne.s32.totalorder %s236, %s237
      %p248 = scmp.eq.s32.totalorder %s34, 0
      %p249 = por %p247, %p248
      %p250 = scmp.ne.s32.totalorder %s236, %s237
      %p251 = scmp.eq.s32.totalorder %s35, 3
      %p252 = por %p250, %p251
      %p254 = scmp.ne.s32.totalorder %s237, %s253
      %p255 = scmp.eq.s32.totalorder %s35, 0
      %p256 = por %p254, %p255
      %s257 = ssub.s32 %s29, %s36
      %p258 = scmp.eq.s32.totalorder %s257, 0
      %s260 = sadd.s32 %s259, 1
      %s261 = scalar_select %p258, %s259, %s260
      %p264 = pneg %p258
      %p265 = scmp.eq.s32.totalorder %s29, 3
      %p266 = por %p264, %p265
      %p267 = scmp.ne.s32.totalorder %s259, %s262
      %p268 = scmp.eq.s32.totalorder %s29, 0
      %p269 = por %p267, %p268
      %p270 = scmp.ne.s32.totalorder %s259, %s262
      %p271 = scmp.eq.s32.totalorder %s34, 3
      %p272 = por %p270, %p271
      %p273 = scmp.ne.s32.totalorder %s262, %s263
      %p274 = scmp.eq.s32.totalorder %s34, 0
      %p275 = por %p273, %p274
      %p276 = scmp.ne.s32.totalorder %s262, %s263
      %p277 = scmp.eq.s32.totalorder %s35, 3
      %p278 = por %p276, %p277
      %p280 = scmp.ne.s32.totalorder %s263, %s279
      %p281 = scmp.eq.s32.totalorder %s35, 0
      %p282 = por %p280, %p281
      %p283 = scmp.le.s32.totalorder 1, %s29
      %p284 = scmp.lt.s32.totalorder %s29, 5
      %p285 = pnand %p283, %p284
      %p286 = pneg %p285
      // Predicated region
      $region9: #{tpu_custom_call.1} parent=5 // pred_check
        _
      $region10: #{tpu_custom_call.1} parent=5 // pred_check_branch
        %288 = sbr.rel (%p285) target = $region12
      $region11: #{tpu_custom_call.1} parent=5 // pred_region
        %s289 = ssub.s32 %s29, 1
        // Predicated region
        $region13: #{tpu_custom_call.1} parent=11 // pred_check
          %p290 = pneg %p76
        $region14: #{tpu_custom_call.1} parent=11 // pred_check_branch
          %292 = sbr.rel (%p290) target = $region16
        $region15: #{tpu_custom_call.1} parent=11 // pred_region
          %294 = vsyncadd [#allocation6], 0
          %s295 = sshll.u32 %s1, 4
          %s296 = int_to_ptr.hbm [resolvable:$true] %s295
          %s297 = sshll.u32 [#allocation5], 4
          %s298 = int_to_ptr.vmem [resolvable:$true] %s297
          %303 = dma.hbm_to_vmem [thread:$0]  %s296, 8192, %s298, [#allocation6], 128, 128, 8
        $region16: #{tpu_custom_call.1} parent=11 // pred_fallthru
          _
        // Predicated region
        $region17: #{tpu_custom_call.1} parent=11 // pred_check
          %p304 = pneg %p97
        $region18: #{tpu_custom_call.1} parent=11 // pred_check_branch
          %306 = sbr.rel (%p304) target = $region20
        $region19: #{tpu_custom_call.1} parent=11 // pred_region
          %308 = vsyncadd [#allocation6], 0
          %s310 = sshll.u32 %s2, 4
          %s311 = int_to_ptr.hbm [resolvable:$true] %s310
          %s312 = sshll.u32 [#allocation7], 4
          %s313 = int_to_ptr.vmem [resolvable:$true] %s312
          %315 = dma.hbm_to_vmem [thread:$0]  %s311, 32, %s313, [#allocation6]
        $region20: #{tpu_custom_call.1} parent=11 // pred_fallthru
          _
        // Predicated region
        $region21: #{tpu_custom_call.1} parent=11 // pred_check
          %p316 = pneg %p118
        $region22: #{tpu_custom_call.1} parent=11 // pred_check_branch
          %318 = sbr.rel (%p316) target = $region24
        $region23: #{tpu_custom_call.1} parent=11 // pred_region
          %320 = vsyncadd [#allocation9], 0
          %s321 = sshll.u32 %s3, 4
          %s322 = int_to_ptr.hbm [resolvable:$true] %s321
          %s323 = sshll.u32 [#allocation8], 4
          %s324 = int_to_ptr.vmem [resolvable:$true] %s323
          %329 = dma.hbm_to_vmem [thread:$0]  %s322, 2048, %s324, [#allocation9], 64, 64, 4
        $region24: #{tpu_custom_call.1} parent=11 // pred_fallthru
          _
        // Predicated region
        $region25: #{tpu_custom_call.1} parent=11 // pred_check
          %p330 = pneg %p139
        $region26: #{tpu_custom_call.1} parent=11 // pred_check_branch
          %332 = sbr.rel (%p330) target = $region28
        $region27: #{tpu_custom_call.1} parent=11 // pred_region
          _
        $region28: #{tpu_custom_call.1} parent=11 // pred_fallthru
          _
        // Predicated region
        $region29: #{tpu_custom_call.1} parent=11 // pred_check
          %p333 = pneg %p160
        $region30: #{tpu_custom_call.1} parent=11 // pred_check_branch
          %335 = sbr.rel (%p333) target = $region32
        $region31: #{tpu_custom_call.1} parent=11 // pred_region
          %337 = vsyncadd [#allocation9], 0
          %s338 = sshll.u32 %s5, 4
          %s339 = int_to_ptr.hbm [resolvable:$true] %s338
          %s340 = sshll.u32 [#allocation10], 4
          %s341 = int_to_ptr.vmem [resolvable:$true] %s340
          %346 = dma.hbm_to_vmem [thread:$0]  %s339, 2048, %s341, [#allocation9], 128, 128, 8
        $region32: #{tpu_custom_call.1} parent=11 // pred_fallthru
          _
        // Predicated region
        $region33: #{tpu_custom_call.1} parent=11 // pred_check
          %p347 = pneg %p181
        $region34: #{tpu_custom_call.1} parent=11 // pred_check_branch
          %349 = sbr.rel (%p347) target = $region36
        $region35: #{tpu_custom_call.1} parent=11 // pred_region
          _
        $region36: #{tpu_custom_call.1} parent=11 // pred_fallthru
          _
        // Predicated region
        $region37: #{tpu_custom_call.1} parent=11 // pred_check
          %p350 = pneg %p202
        $region38: #{tpu_custom_call.1} parent=11 // pred_check_branch
          %352 = sbr.rel (%p350) target = $region40
        $region39: #{tpu_custom_call.1} parent=11 // pred_region
          %354 = vsyncadd [#allocation12], 0
          %s355 = sshll.u32 %s7, 4
          %s356 = int_to_ptr.hbm [resolvable:$true] %s355
          %s357 = sshll.u32 [#allocation11], 4
          %s358 = int_to_ptr.vmem [resolvable:$true] %s357
          %363 = dma.hbm_to_vmem [thread:$0]  %s356, 8192, %s358, [#allocation12], 256, 256, 16
        $region40: #{tpu_custom_call.1} parent=11 // pred_fallthru
          _
        // Predicated region
        $region41: #{tpu_custom_call.1} parent=11 // pred_check
          %p364 = pneg %p223
        $region42: #{tpu_custom_call.1} parent=11 // pred_check_branch
          %366 = sbr.rel (%p364) target = $region44
        $region43: #{tpu_custom_call.1} parent=11 // pred_region
          _
        $region44: #{tpu_custom_call.1} parent=11 // pred_fallthru
          _
      $region12: #{tpu_custom_call.1} parent=5 // pred_fallthru
        _
      %p367 = scmp.lt.s32.totalorder %s29, 4
      // Predicated region
      $region45: #{tpu_custom_call.1} parent=5 // pred_check
        %p368 = pneg %p367
      $region46: #{tpu_custom_call.1} parent=5 // pred_check_branch
        %370 = sbr.rel (%p368) target = $region48
      $region47: #{tpu_custom_call.1} parent=5 // pred_region
        // Predicated region
        $region49: #{tpu_custom_call.1} parent=47 // pred_check
          %p371 = pneg %p49
        $region50: #{tpu_custom_call.1} parent=47 // pred_check_branch
          %373 = sbr.rel (%p371) target = $region52
        $region51: #{tpu_custom_call.1} parent=47 // pred_region
          %s374 = sand.u32 %s39, 1
          %s375 = scalar_lea.sflag [#allocation3], %s374
          %s376 = sand.u32 %s39, 1
          %s377 = smul.addr %s376, 512
          %s378 = scalar_lea.vmem [#allocation2], %s377
          %s379 = smul.u32 16, %s29
          %381 = vsyncadd %s375, 0
          %s382 = smul.addr %s379, 4
          %s383 = smul.addr %s382, 8
          %s384 = scalar_lea.hbm %s0, %s383
          %s385 = sshll.u32 %s384, 4
          %s386 = int_to_ptr.hbm [resolvable:$true] %s385
          %s387 = sshll.u32 %s378, 4
          %s388 = int_to_ptr.vmem [resolvable:$true] %s387
          %393 = dma.hbm_to_vmem [thread:$0]  %s386, 8192, %s388, %s375, 512, 512, 32
        $region52: #{tpu_custom_call.1} parent=47 // pred_fallthru
          _
      $region48: #{tpu_custom_call.1} parent=5 // pred_fallthru
        _
      %p394 = scmp.le.s32.totalorder 1, %s29
      %p395 = scmp.lt.s32.totalorder %s29, 5
      %p396 = pnand %p394, %p395
      %p397 = pneg %p396
      // Predicated region
      $region53: #{tpu_custom_call.1} parent=5 // pred_check
        _
      $region54: #{tpu_custom_call.1} parent=5 // pred_check_branch
        %399 = sbr.rel (%p396) target = $region56
      $region55: #{tpu_custom_call.1} parent=5 // pred_region
        %s400 = ssub.s32 %s29, 1
        %s401 = sand.u32 %s42, 1
        %s402 = scalar_lea.sflag [#allocation3], %s401
        %s403 = sand.u32 %s42, 1
        %s404 = smul.addr %s403, 512
        %s405 = scalar_lea.vmem [#allocation2], %s404
        // Predicated region
        $region57: #{tpu_custom_call.1} parent=55 // pred_check
          %p406 = pneg %p55
        $region58: #{tpu_custom_call.1} parent=55 // pred_check_branch
          %408 = sbr.rel (%p406) target = $region60
        $region59: #{tpu_custom_call.1} parent=55 // pred_region
          %410 = dma.done %s402, 8192
        $region60: #{tpu_custom_call.1} parent=55 // pred_fallthru
          _
        // Predicated region
        $region61: #{tpu_custom_call.1} parent=55 // pred_check
          %p411 = pneg %p76
        $region62: #{tpu_custom_call.1} parent=55 // pred_check_branch
          %413 = sbr.rel (%p411) target = $region64
        $region63: #{tpu_custom_call.1} parent=55 // pred_region
          %415 = dma.done [#allocation6], 8192
        $region64: #{tpu_custom_call.1} parent=55 // pred_fallthru
          _
        // Predicated region
        $region65: #{tpu_custom_call.1} parent=55 // pred_check
          %p416 = pneg %p97
        $region66: #{tpu_custom_call.1} parent=55 // pred_check_branch
          %418 = sbr.rel (%p416) target = $region68
        $region67: #{tpu_custom_call.1} parent=55 // pred_region
          %420 = dma.done [#allocation6], 32
        $region68: #{tpu_custom_call.1} parent=55 // pred_fallthru
          _
        // Predicated region
        $region69: #{tpu_custom_call.1} parent=55 // pred_check
          %p421 = pneg %p118
        $region70: #{tpu_custom_call.1} parent=55 // pred_check_branch
          %423 = sbr.rel (%p421) target = $region72
        $region71: #{tpu_custom_call.1} parent=55 // pred_region
          %425 = dma.done [#allocation9], 2048
        $region72: #{tpu_custom_call.1} parent=55 // pred_fallthru
          _
        // Predicated region
        $region73: #{tpu_custom_call.1} parent=55 // pred_check
          %p426 = pneg %p160
        $region74: #{tpu_custom_call.1} parent=55 // pred_check_branch
          %428 = sbr.rel (%p426) target = $region76
        $region75: #{tpu_custom_call.1} parent=55 // pred_region
          %430 = dma.done [#allocation9], 2048
        $region76: #{tpu_custom_call.1} parent=55 // pred_fallthru
          _
        // Predicated region
        $region77: #{tpu_custom_call.1} parent=55 // pred_check
          %p431 = pneg %p202
        $region78: #{tpu_custom_call.1} parent=55 // pred_check_branch
          %433 = sbr.rel (%p431) target = $region80
        $region79: #{tpu_custom_call.1} parent=55 // pred_region
          %435 = dma.done [#allocation12], 8192
        $region80: #{tpu_custom_call.1} parent=55 // pred_fallthru
          _
        %s436 = sand.u32 %s42, 1
        %s437 = scalar_lea.sflag [#allocation3], %s436
        %s438 = sand.u32 %s42, 1
        %s439 = smul.addr %s438, 512
        %s440 = scalar_lea.vmem [#allocation2], %s439
        %p441 = pneg %p55
        %p442 = pneg %p52
        %p443 = pneg %p76
        %p444 = pneg %p73
        %p445 = pneg %p97
        %p446 = pneg %p94
        %p447 = pneg %p118
        %p448 = pneg %p115
        %p449 = pneg %p139
        %p450 = pneg %p136
        %p451 = pneg %p160
        %p452 = pneg %p157
        %p453 = pneg %p181
        %p454 = pneg %p178
        %p455 = pneg %p202
        %p456 = pneg %p199
        %p457 = pneg %p223
        %p458 = pneg %p220
        %p459 = pneg %p249
        %p460 = pneg %p246
        %s461 = sand.u32 %s236, 1
        %s462 = scalar_lea.sflag [#allocation4], %s461
        %s463 = sand.u32 %s236, 1
        %s464 = smul.addr %s463, 128
        %s465 = scalar_lea.vmem [#allocation13], %s464
        %p466 = pneg %p275
        %p467 = pneg %p272
        %s468 = sand.u32 %s262, 1
        %s469 = scalar_lea.sflag [#allocation15], %s468
        %s470 = sand.u32 %s262, 1
        %s471 = smul.addr %s470, 512
        %s472 = scalar_lea.vmem [#allocation14], %s471
        %s473 = smul.u32 16, %s34
        %s474 = smul.u32 16, %s34
        %s475 = smul.u32 16, %s34
        %v476 = vld [vmem:[%s405] sm:$0xff]
        %v477 = vld [vmem:[%s405 + $0x8] sm:$0xff]
        %v478 = vld [vmem:[%s405 + $0x10] sm:$0xff]
        %v479 = vld [vmem:[%s405 + $0x18] sm:$0xff]
        %v480 = vld [vmem:[%s405 + $0x20] sm:$0xff]
        %v481 = vld [vmem:[%s405 + $0x28] sm:$0xff]
        %v482 = vld [vmem:[%s405 + $0x30] sm:$0xff]
        %v483 = vld [vmem:[%s405 + $0x38] sm:$0xff]
        %v484 = vld [vmem:[%s405 + $0x40] sm:$0xff]
        %v485 = vld [vmem:[%s405 + $0x48] sm:$0xff]
        %v486 = vld [vmem:[%s405 + $0x50] sm:$0xff]
        %v487 = vld [vmem:[%s405 + $0x58] sm:$0xff]
        %v488 = vld [vmem:[%s405 + $0x60] sm:$0xff]
        %v489 = vld [vmem:[%s405 + $0x68] sm:$0xff]
        %v490 = vld [vmem:[%s405 + $0x70] sm:$0xff]
        %v491 = vld [vmem:[%s405 + $0x78] sm:$0xff]
        %v492 = vld [vmem:[%s405 + $0x80] sm:$0xff]
        %v493 = vld [vmem:[%s405 + $0x88] sm:$0xff]
        %v494 = vld [vmem:[%s405 + $0x90] sm:$0xff]
        %v495 = vld [vmem:[%s405 + $0x98] sm:$0xff]
        %v496 = vld [vmem:[%s405 + $0xa0] sm:$0xff]
        %v497 = vld [vmem:[%s405 + $0xa8] sm:$0xff]
        %v498 = vld [vmem:[%s405 + $0xb0] sm:$0xff]
        %v499 = vld [vmem:[%s405 + $0xb8] sm:$0xff]
        %v500 = vld [vmem:[%s405 + $0xc0] sm:$0xff]
        %v501 = vld [vmem:[%s405 + $0xc8] sm:$0xff]
        %v502 = vld [vmem:[%s405 + $0xd0] sm:$0xff]
        %v503 = vld [vmem:[%s405 + $0xd8] sm:$0xff]
        %v504 = vld [vmem:[%s405 + $0xe0] sm:$0xff]
        %v505 = vld [vmem:[%s405 + $0xe8] sm:$0xff]
        %v506 = vld [vmem:[%s405 + $0xf0] sm:$0xff]
        %v507 = vld [vmem:[%s405 + $0xf8] sm:$0xff]
        %v508 = vld [vmem:[%s405 + $0x100] sm:$0xff]
        %v509 = vld [vmem:[%s405 + $0x108] sm:$0xff]
        %v510 = vld [vmem:[%s405 + $0x110] sm:$0xff]
        %v511 = vld [vmem:[%s405 + $0x118] sm:$0xff]
        %v512 = vld [vmem:[%s405 + $0x120] sm:$0xff]
        %v513 = vld [vmem:[%s405 + $0x128] sm:$0xff]
        %v514 = vld [vmem:[%s405 + $0x130] sm:$0xff]
        %v515 = vld [vmem:[%s405 + $0x138] sm:$0xff]
        %v516 = vld [vmem:[%s405 + $0x140] sm:$0xff]
        %v517 = vld [vmem:[%s405 + $0x148] sm:$0xff]
        %v518 = vld [vmem:[%s405 + $0x150] sm:$0xff]
        %v519 = vld [vmem:[%s405 + $0x158] sm:$0xff]
        %v520 = vld [vmem:[%s405 + $0x160] sm:$0xff]
        %v521 = vld [vmem:[%s405 + $0x168] sm:$0xff]
        %v522 = vld [vmem:[%s405 + $0x170] sm:$0xff]
        %v523 = vld [vmem:[%s405 + $0x178] sm:$0xff]
        %v524 = vld [vmem:[%s405 + $0x180] sm:$0xff]
        %v525 = vld [vmem:[%s405 + $0x188] sm:$0xff]
        %v526 = vld [vmem:[%s405 + $0x190] sm:$0xff]
        %v527 = vld [vmem:[%s405 + $0x198] sm:$0xff]
        %v528 = vld [vmem:[%s405 + $0x1a0] sm:$0xff]
        %v529 = vld [vmem:[%s405 + $0x1a8] sm:$0xff]
        %v530 = vld [vmem:[%s405 + $0x1b0] sm:$0xff]
        %v531 = vld [vmem:[%s405 + $0x1b8] sm:$0xff]
        %v532 = vld [vmem:[%s405 + $0x1c0] sm:$0xff]
        %v533 = vld [vmem:[%s405 + $0x1c8] sm:$0xff]
        %v534 = vld [vmem:[%s405 + $0x1d0] sm:$0xff]
        %v535 = vld [vmem:[%s405 + $0x1d8] sm:$0xff]
        %v536 = vld [vmem:[%s405 + $0x1e0] sm:$0xff]
        %v537 = vld [vmem:[%s405 + $0x1e8] sm:$0xff]
        %v538 = vld [vmem:[%s405 + $0x1f0] sm:$0xff]
        %v539 = vld [vmem:[%s405 + $0x1f8] sm:$0xff]
        %v540 = vpack.c.bf16 %v480, %v476
        %v541 = vpack.c.bf16 %v481, %v477
        %v542 = vpack.c.bf16 %v482, %v478
        %v543 = vpack.c.bf16 %v483, %v479
        %v544 = vpack.c.bf16 %v488, %v484
        %v545 = vpack.c.bf16 %v489, %v485
        %v546 = vpack.c.bf16 %v490, %v486
        %v547 = vpack.c.bf16 %v491, %v487
        %v548 = vpack.c.bf16 %v496, %v492
        %v549 = vpack.c.bf16 %v497, %v493
        %v550 = vpack.c.bf16 %v498, %v494
        %v551 = vpack.c.bf16 %v499, %v495
        %v552 = vpack.c.bf16 %v504, %v500
        %v553 = vpack.c.bf16 %v505, %v501
        %v554 = vpack.c.bf16 %v506, %v502
        %v555 = vpack.c.bf16 %v507, %v503
        %v556 = vpack.c.bf16 %v512, %v508
        %v557 = vpack.c.bf16 %v513, %v509
        %v558 = vpack.c.bf16 %v514, %v510
        %v559 = vpack.c.bf16 %v515, %v511
        %v560 = vpack.c.bf16 %v520, %v516
        %v561 = vpack.c.bf16 %v521, %v517
        %v562 = vpack.c.bf16 %v522, %v518
        %v563 = vpack.c.bf16 %v523, %v519
        %v564 = vpack.c.bf16 %v528, %v524
        %v565 = vpack.c.bf16 %v529, %v525
        %v566 = vpack.c.bf16 %v530, %v526
        %v567 = vpack.c.bf16 %v531, %v527
        %v568 = vpack.c.bf16 %v536, %v532
        %v569 = vpack.c.bf16 %v537, %v533
        %v570 = vpack.c.bf16 %v538, %v534
        %v571 = vpack.c.bf16 %v539, %v535
        %v572 = vld [vmem:[#allocation5] sm:$0xff]
        %v573 = vld [vmem:[#allocation5 + $0x8] sm:$0xff]
        %v574 = vld [vmem:[#allocation5 + $0x10] sm:$0xff]
        %v575 = vld [vmem:[#allocation5 + $0x18] sm:$0xff]
        %v576 = vld [vmem:[#allocation5 + $0x20] sm:$0xff]
        %v577 = vld [vmem:[#allocation5 + $0x28] sm:$0xff]
        %v578 = vld [vmem:[#allocation5 + $0x30] sm:$0xff]
        %v579 = vld [vmem:[#allocation5 + $0x38] sm:$0xff]
        %v580 = vld [vmem:[#allocation5 + $0x40] sm:$0xff]
        %v581 = vld [vmem:[#allocation5 + $0x48] sm:$0xff]
        %v582 = vld [vmem:[#allocation5 + $0x50] sm:$0xff]
        %v583 = vld [vmem:[#allocation5 + $0x58] sm:$0xff]
        %v584 = vld [vmem:[#allocation5 + $0x60] sm:$0xff]
        %v585 = vld [vmem:[#allocation5 + $0x68] sm:$0xff]
        %v586 = vld [vmem:[#allocation5 + $0x70] sm:$0xff]
        %v587 = vld [vmem:[#allocation5 + $0x78] sm:$0xff]
        %v588 = vld [vmem:[#allocation5 + $0x80] sm:$0xff]
        %v589 = vld [vmem:[#allocation5 + $0x88] sm:$0xff]
        %v590 = vld [vmem:[#allocation5 + $0x90] sm:$0xff]
        %v591 = vld [vmem:[#allocation5 + $0x98] sm:$0xff]
        %v592 = vld [vmem:[#allocation5 + $0xa0] sm:$0xff]
        %v593 = vld [vmem:[#allocation5 + $0xa8] sm:$0xff]
        %v594 = vld [vmem:[#allocation5 + $0xb0] sm:$0xff]
        %v595 = vld [vmem:[#allocation5 + $0xb8] sm:$0xff]
        %v596 = vld [vmem:[#allocation5 + $0xc0] sm:$0xff]
        %v597 = vld [vmem:[#allocation5 + $0xc8] sm:$0xff]
        %v598 = vld [vmem:[#allocation5 + $0xd0] sm:$0xff]
        %v599 = vld [vmem:[#allocation5 + $0xd8] sm:$0xff]
        %v600 = vld [vmem:[#allocation5 + $0xe0] sm:$0xff]
        %v601 = vld [vmem:[#allocation5 + $0xe8] sm:$0xff]
        %v602 = vld [vmem:[#allocation5 + $0xf0] sm:$0xff]
        %v603 = vld [vmem:[#allocation5 + $0xf8] sm:$0xff]
        %v604 = vld [vmem:[#allocation5 + $0x100] sm:$0xff]
        %v605 = vld [vmem:[#allocation5 + $0x108] sm:$0xff]
        %v606 = vld [vmem:[#allocation5 + $0x110] sm:$0xff]
        %v607 = vld [vmem:[#allocation5 + $0x118] sm:$0xff]
        %v608 = vld [vmem:[#allocation5 + $0x120] sm:$0xff]
        %v609 = vld [vmem:[#allocation5 + $0x128] sm:$0xff]
        %v610 = vld [vmem:[#allocation5 + $0x130] sm:$0xff]
        %v611 = vld [vmem:[#allocation5 + $0x138] sm:$0xff]
        %v612 = vld [vmem:[#allocation5 + $0x140] sm:$0xff]
        %v613 = vld [vmem:[#allocation5 + $0x148] sm:$0xff]
        %v614 = vld [vmem:[#allocation5 + $0x150] sm:$0xff]
        %v615 = vld [vmem:[#allocation5 + $0x158] sm:$0xff]
        %v616 = vld [vmem:[#allocation5 + $0x160] sm:$0xff]
        %v617 = vld [vmem:[#allocation5 + $0x168] sm:$0xff]
        %v618 = vld [vmem:[#allocation5 + $0x170] sm:$0xff]
        %v619 = vld [vmem:[#allocation5 + $0x178] sm:$0xff]
        %v620 = vld [vmem:[#allocation5 + $0x180] sm:$0xff]
        %v621 = vld [vmem:[#allocation5 + $0x188] sm:$0xff]
        %v622 = vld [vmem:[#allocation5 + $0x190] sm:$0xff]
        %v623 = vld [vmem:[#allocation5 + $0x198] sm:$0xff]
        %v624 = vld [vmem:[#allocation5 + $0x1a0] sm:$0xff]
        %v625 = vld [vmem:[#allocation5 + $0x1a8] sm:$0xff]
        %v626 = vld [vmem:[#allocation5 + $0x1b0] sm:$0xff]
        %v627 = vld [vmem:[#allocation5 + $0x1b8] sm:$0xff]
        %v628 = vld [vmem:[#allocation5 + $0x1c0] sm:$0xff]
        %v629 = vld [vmem:[#allocation5 + $0x1c8] sm:$0xff]
        %v630 = vld [vmem:[#allocation5 + $0x1d0] sm:$0xff]
        %v631 = vld [vmem:[#allocation5 + $0x1d8] sm:$0xff]
        %v632 = vld [vmem:[#allocation5 + $0x1e0] sm:$0xff]
        %v633 = vld [vmem:[#allocation5 + $0x1e8] sm:$0xff]
        %v634 = vld [vmem:[#allocation5 + $0x1f0] sm:$0xff]
        %v635 = vld [vmem:[#allocation5 + $0x1f8] sm:$0xff]
        %v636 = vld [vmem:[#allocation7] sm:$0x3]
        %v638 = vperm.slane %v636, 0
        %v639 = vperm.slane %v636, 1
        %v706 = vunpack.c.l.b16 %v572
        %v707 = vunpack.c.h.b16 %v572
        %v708 = vunpack.c.l.b16 %v573
        %v709 = vunpack.c.h.b16 %v573
        %v710 = vunpack.c.l.b16 %v574
        %v711 = vunpack.c.h.b16 %v574
        %v712 = vunpack.c.l.b16 %v575
        %v713 = vunpack.c.h.b16 %v575
        %v714 = vunpack.c.l.b16 %v576
        %v715 = vunpack.c.h.b16 %v576
        %v716 = vunpack.c.l.b16 %v577
        %v717 = vunpack.c.h.b16 %v577
        %v718 = vunpack.c.l.b16 %v578
        %v719 = vunpack.c.h.b16 %v578
        %v720 = vunpack.c.l.b16 %v579
        %v721 = vunpack.c.h.b16 %v579
        %v722 = vunpack.c.l.b16 %v580
        %v723 = vunpack.c.h.b16 %v580
        %v724 = vunpack.c.l.b16 %v581
        %v725 = vunpack.c.h.b16 %v581
        %v726 = vunpack.c.l.b16 %v582
        %v727 = vunpack.c.h.b16 %v582
        %v728 = vunpack.c.l.b16 %v583
        %v729 = vunpack.c.h.b16 %v583
        %v730 = vunpack.c.l.b16 %v584
        %v731 = vunpack.c.h.b16 %v584
        %v732 = vunpack.c.l.b16 %v585
        %v733 = vunpack.c.h.b16 %v585
        %v734 = vunpack.c.l.b16 %v586
        %v735 = vunpack.c.h.b16 %v586
        %v736 = vunpack.c.l.b16 %v587
        %v737 = vunpack.c.h.b16 %v587
        %v738 = vunpack.c.l.b16 %v588
        %v739 = vunpack.c.h.b16 %v588
        %v740 = vunpack.c.l.b16 %v589
        %v741 = vunpack.c.h.b16 %v589
        %v742 = vunpack.c.l.b16 %v590
        %v743 = vunpack.c.h.b16 %v590
        %v744 = vunpack.c.l.b16 %v591
        %v745 = vunpack.c.h.b16 %v591
        %v746 = vunpack.c.l.b16 %v592
        %v747 = vunpack.c.h.b16 %v592
        %v748 = vunpack.c.l.b16 %v593
        %v749 = vunpack.c.h.b16 %v593
        %v750 = vunpack.c.l.b16 %v594
        %v751 = vunpack.c.h.b16 %v594
        %v752 = vunpack.c.l.b16 %v595
        %v753 = vunpack.c.h.b16 %v595
        %v754 = vunpack.c.l.b16 %v596
        %v755 = vunpack.c.h.b16 %v596
        %v756 = vunpack.c.l.b16 %v597
        %v757 = vunpack.c.h.b16 %v597
        %v758 = vunpack.c.l.b16 %v598
        %v759 = vunpack.c.h.b16 %v598
        %v760 = vunpack.c.l.b16 %v599
        %v761 = vunpack.c.h.b16 %v599
        %v762 = vunpack.c.l.b16 %v600
        %v763 = vunpack.c.h.b16 %v600
        %v764 = vunpack.c.l.b16 %v601
        %v765 = vunpack.c.h.b16 %v601
        %v766 = vunpack.c.l.b16 %v602
        %v767 = vunpack.c.h.b16 %v602
        %v768 = vunpack.c.l.b16 %v603
        %v769 = vunpack.c.h.b16 %v603
        %v770 = vunpack.c.l.b16 %v604
        %v771 = vunpack.c.h.b16 %v604
        %v772 = vunpack.c.l.b16 %v605
        %v773 = vunpack.c.h.b16 %v605
        %v774 = vunpack.c.l.b16 %v606
        %v775 = vunpack.c.h.b16 %v606
        %v776 = vunpack.c.l.b16 %v607
        %v777 = vunpack.c.h.b16 %v607
        %v778 = vunpack.c.l.b16 %v608
        %v779 = vunpack.c.h.b16 %v608
        %v780 = vunpack.c.l.b16 %v609
        %v781 = vunpack.c.h.b16 %v609
        %v782 = vunpack.c.l.b16 %v610
        %v783 = vunpack.c.h.b16 %v610
        %v784 = vunpack.c.l.b16 %v611
        %v785 = vunpack.c.h.b16 %v611
        %v786 = vunpack.c.l.b16 %v612
        %v787 = vunpack.c.h.b16 %v612
        %v788 = vunpack.c.l.b16 %v613
        %v789 = vunpack.c.h.b16 %v613
        %v790 = vunpack.c.l.b16 %v614
        %v791 = vunpack.c.h.b16 %v614
        %v792 = vunpack.c.l.b16 %v615
        %v793 = vunpack.c.h.b16 %v615
        %v794 = vunpack.c.l.b16 %v616
        %v795 = vunpack.c.h.b16 %v616
        %v796 = vunpack.c.l.b16 %v617
        %v797 = vunpack.c.h.b16 %v617
        %v798 = vunpack.c.l.b16 %v618
        %v799 = vunpack.c.h.b16 %v618
        %v800 = vunpack.c.l.b16 %v619
        %v801 = vunpack.c.h.b16 %v619
        %v802 = vunpack.c.l.b16 %v620
        %v803 = vunpack.c.h.b16 %v620
        %v804 = vunpack.c.l.b16 %v621
        %v805 = vunpack.c.h.b16 %v621
        %v806 = vunpack.c.l.b16 %v622
        %v807 = vunpack.c.h.b16 %v622
        %v808 = vunpack.c.l.b16 %v623
        %v809 = vunpack.c.h.b16 %v623
        %v810 = vunpack.c.l.b16 %v624
        %v811 = vunpack.c.h.b16 %v624
        %v812 = vunpack.c.l.b16 %v625
        %v813 = vunpack.c.h.b16 %v625
        %v814 = vunpack.c.l.b16 %v626
        %v815 = vunpack.c.h.b16 %v626
        %v816 = vunpack.c.l.b16 %v627
        %v817 = vunpack.c.h.b16 %v627
        %v818 = vunpack.c.l.b16 %v628
        %v819 = vunpack.c.h.b16 %v628
        %v820 = vunpack.c.l.b16 %v629
        %v821 = vunpack.c.h.b16 %v629
        %v822 = vunpack.c.l.b16 %v630
        %v823 = vunpack.c.h.b16 %v630
        %v824 = vunpack.c.l.b16 %v631
        %v825 = vunpack.c.h.b16 %v631
        %v826 = vunpack.c.l.b16 %v632
        %v827 = vunpack.c.h.b16 %v632
        %v828 = vunpack.c.l.b16 %v633
        %v829 = vunpack.c.h.b16 %v633
        %v830 = vunpack.c.l.b16 %v634
        %v831 = vunpack.c.h.b16 %v634
        %v832 = vunpack.c.l.b16 %v635
        %v833 = vunpack.c.h.b16 %v635
        %v834 = vpack.c.b16 %v708, %v706
        %v835 = vpack.c.b16 %v709, %v707
        %v836 = vpack.c.b16 %v712, %v710
        %v837 = vpack.c.b16 %v713, %v711
        %v838 = vpack.c.b16 %v716, %v714
        %v839 = vpack.c.b16 %v717, %v715
        %v840 = vpack.c.b16 %v720, %v718
        %v841 = vpack.c.b16 %v721, %v719
        %v842 = vpack.c.b16 %v724, %v722
        %v843 = vpack.c.b16 %v725, %v723
        %v844 = vpack.c.b16 %v728, %v726
        %v845 = vpack.c.b16 %v729, %v727
        %v846 = vpack.c.b16 %v732, %v730
        %v847 = vpack.c.b16 %v733, %v731
        %v848 = vpack.c.b16 %v736, %v734
        %v849 = vpack.c.b16 %v737, %v735
        %v850 = vpack.c.b16 %v740, %v738
        %v851 = vpack.c.b16 %v741, %v739
        %v852 = vpack.c.b16 %v744, %v742
        %v853 = vpack.c.b16 %v745, %v743
        %v854 = vpack.c.b16 %v748, %v746
        %v855 = vpack.c.b16 %v749, %v747
        %v856 = vpack.c.b16 %v752, %v750
        %v857 = vpack.c.b16 %v753, %v751
        %v858 = vpack.c.b16 %v756, %v754
        %v859 = vpack.c.b16 %v757, %v755
        %v860 = vpack.c.b16 %v760, %v758
        %v861 = vpack.c.b16 %v761, %v759
        %v862 = vpack.c.b16 %v764, %v762
        %v863 = vpack.c.b16 %v765, %v763
        %v864 = vpack.c.b16 %v768, %v766
        %v865 = vpack.c.b16 %v769, %v767
        %v866 = vpack.c.b16 %v772, %v770
        %v867 = vpack.c.b16 %v773, %v771
        %v868 = vpack.c.b16 %v776, %v774
        %v869 = vpack.c.b16 %v777, %v775
        %v870 = vpack.c.b16 %v780, %v778
        %v871 = vpack.c.b16 %v781, %v779
        %v872 = vpack.c.b16 %v784, %v782
        %v873 = vpack.c.b16 %v785, %v783
        %v874 = vpack.c.b16 %v788, %v786
        %v875 = vpack.c.b16 %v789, %v787
        %v876 = vpack.c.b16 %v792, %v790
        %v877 = vpack.c.b16 %v793, %v791
        %v878 = vpack.c.b16 %v796, %v794
        %v879 = vpack.c.b16 %v797, %v795
        %v880 = vpack.c.b16 %v800, %v798
        %v881 = vpack.c.b16 %v801, %v799
        %v882 = vpack.c.b16 %v804, %v802
        %v883 = vpack.c.b16 %v805, %v803
        %v884 = vpack.c.b16 %v808, %v806
        %v885 = vpack.c.b16 %v809, %v807
        %v886 = vpack.c.b16 %v812, %v810
        %v887 = vpack.c.b16 %v813, %v811
        %v888 = vpack.c.b16 %v816, %v814
        %v889 = vpack.c.b16 %v817, %v815
        %v890 = vpack.c.b16 %v820, %v818
        %v891 = vpack.c.b16 %v821, %v819
        %v892 = vpack.c.b16 %v824, %v822
        %v893 = vpack.c.b16 %v825, %v823
        %v894 = vpack.c.b16 %v828, %v826
        %v895 = vpack.c.b16 %v829, %v827
        %v896 = vpack.c.b16 %v832, %v830
        %v897 = vpack.c.b16 %v833, %v831
        %962 = vmatpush.bf16.msra.mxu0 %v848
        %963 = vmatpush.bf16.msra.mxu0 %v846
        %964 = vmatpush.bf16.msra.mxu0 %v844
        %965 = vmatpush.bf16.msra.mxu0 %v842
        %966 = vmatpush.bf16.msra.mxu0 %v840
        %967 = vmatpush.bf16.msra.mxu0 %v838
        %968 = vmatpush.bf16.msra.mxu0 %v836
        %969 = vmatpush.bf16.msra.mxu0 %v834
        %970 = vmatmul.bf16.gmra.mxu0 %v540
        %v971 = vpop.f32.mrf.mxu0
        %v972 = vadd.f32 %v638, %v971
        %v973 = vpop.f32.mrf.mxu0
        %v974 = vadd.f32 %v638, %v973
        %975 = vmatmul.bf16.gmra.mxu0 %v544
        %v976 = vpop.f32.mrf.mxu0
        %v977 = vadd.f32 %v638, %v976
        %v978 = vpop.f32.mrf.mxu0
        %v979 = vadd.f32 %v638, %v978
        %980 = vmatmul.bf16.gmra.mxu0 %v548
        %v981 = vpop.f32.mrf.mxu0
        %v982 = vadd.f32 %v638, %v981
        %v983 = vpop.f32.mrf.mxu0
        %v984 = vadd.f32 %v638, %v983
        %985 = vmatmul.bf16.gmra.mxu0 %v552
        %v986 = vpop.f32.mrf.mxu0
        %v987 = vadd.f32 %v638, %v986
        %v988 = vpop.f32.mrf.mxu0
        %v989 = vadd.f32 %v638, %v988
        %990 = vmatmul.bf16.gmra.mxu0 %v556
        %v991 = vpop.f32.mrf.mxu0
        %v992 = vadd.f32 %v638, %v991
        %v993 = vpop.f32.mrf.mxu0
        %v994 = vadd.f32 %v638, %v993
        %995 = vmatmul.bf16.gmra.mxu0 %v560
        %v996 = vpop.f32.mrf.mxu0
        %v997 = vadd.f32 %v638, %v996
        %v998 = vpop.f32.mrf.mxu0
        %v999 = vadd.f32 %v638, %v998
        %1000 = vmatmul.bf16.gmra.mxu0 %v564
        %v1001 = vpop.f32.mrf.mxu0
        %v1002 = vadd.f32 %v638, %v1001
        %v1003 = vpop.f32.mrf.mxu0
        %v1004 = vadd.f32 %v638, %v1003
        %1005 = vmatmul.bf16.gmra.mxu0 %v568
        %v1006 = vpop.f32.mrf.mxu0
        %v1007 = vadd.f32 %v638, %v1006
        %v1008 = vpop.f32.mrf.mxu0
        %v1009 = vadd.f32 %v638, %v1008
        %1010 = vdwg.mxu0
        %1011 = vmatpush.bf16.msra.mxu0 %v864
        %1012 = vmatpush.bf16.msra.mxu0 %v862
        %1013 = vmatpush.bf16.msra.mxu0 %v860
        %1014 = vmatpush.bf16.msra.mxu0 %v858
        %1015 = vmatpush.bf16.msra.mxu0 %v856
        %1016 = vmatpush.bf16.msra.mxu0 %v854
        %1017 = vmatpush.bf16.msra.mxu0 %v852
        %1018 = vmatpush.bf16.msra.mxu0 %v850
        %1019 = vmatmul.bf16.gmra.mxu0 %v541
        %v1020 = vpop.f32.mrf.mxu0
        %v1021 = vadd.f32 %v972, %v1020
        %v1022 = vpop.f32.mrf.mxu0
        %v1023 = vadd.f32 %v974, %v1022
        %1024 = vmatmul.bf16.gmra.mxu0 %v545
        %v1025 = vpop.f32.mrf.mxu0
        %v1026 = vadd.f32 %v977, %v1025
        %v1027 = vpop.f32.mrf.mxu0
        %v1028 = vadd.f32 %v979, %v1027
        %1029 = vmatmul.bf16.gmra.mxu0 %v549
        %v1030 = vpop.f32.mrf.mxu0
        %v1031 = vadd.f32 %v982, %v1030
        %v1032 = vpop.f32.mrf.mxu0
        %v1033 = vadd.f32 %v984, %v1032
        %1034 = vmatmul.bf16.gmra.mxu0 %v553
        %v1035 = vpop.f32.mrf.mxu0
        %v1036 = vadd.f32 %v987, %v1035
        %v1037 = vpop.f32.mrf.mxu0
        %v1038 = vadd.f32 %v989, %v1037
        %1039 = vmatmul.bf16.gmra.mxu0 %v557
        %v1040 = vpop.f32.mrf.mxu0
        %v1041 = vadd.f32 %v992, %v1040
        %v1042 = vpop.f32.mrf.mxu0
        %v1043 = vadd.f32 %v994, %v1042
        %1044 = vmatmul.bf16.gmra.mxu0 %v561
        %v1045 = vpop.f32.mrf.mxu0
        %v1046 = vadd.f32 %v997, %v1045
        %v1047 = vpop.f32.mrf.mxu0
        %v1048 = vadd.f32 %v999, %v1047
        %1049 = vmatmul.bf16.gmra.mxu0 %v565
        %v1050 = vpop.f32.mrf.mxu0
        %v1051 = vadd.f32 %v1002, %v1050
        %v1052 = vpop.f32.mrf.mxu0
        %v1053 = vadd.f32 %v1004, %v1052
        %1054 = vmatmul.bf16.gmra.mxu0 %v569
        %v1055 = vpop.f32.mrf.mxu0
        %v1056 = vadd.f32 %v1007, %v1055
        %v1057 = vpop.f32.mrf.mxu0
        %v1058 = vadd.f32 %v1009, %v1057
        %1059 = vdwg.mxu0
        %1060 = vmatpush.bf16.msra.mxu0 %v880
        %1061 = vmatpush.bf16.msra.mxu0 %v878
        %1062 = vmatpush.bf16.msra.mxu0 %v876
        %1063 = vmatpush.bf16.msra.mxu0 %v874
        %1064 = vmatpush.bf16.msra.mxu0 %v872
        %1065 = vmatpush.bf16.msra.mxu0 %v870
        %1066 = vmatpush.bf16.msra.mxu0 %v868
        %1067 = vmatpush.bf16.msra.mxu0 %v866
        %1068 = vmatmul.bf16.gmra.mxu0 %v542
        %v1069 = vpop.f32.mrf.mxu0
        %v1070 = vadd.f32 %v1021, %v1069
        %v1071 = vpop.f32.mrf.mxu0
        %v1072 = vadd.f32 %v1023, %v1071
        %1073 = vmatmul.bf16.gmra.mxu0 %v546
        %v1074 = vpop.f32.mrf.mxu0
        %v1075 = vadd.f32 %v1026, %v1074
        %v1076 = vpop.f32.mrf.mxu0
        %v1077 = vadd.f32 %v1028, %v1076
        %1078 = vmatmul.bf16.gmra.mxu0 %v550
        %v1079 = vpop.f32.mrf.mxu0
        %v1080 = vadd.f32 %v1031, %v1079
        %v1081 = vpop.f32.mrf.mxu0
        %v1082 = vadd.f32 %v1033, %v1081
        %1083 = vmatmul.bf16.gmra.mxu0 %v554
        %v1084 = vpop.f32.mrf.mxu0
        %v1085 = vadd.f32 %v1036, %v1084
        %v1086 = vpop.f32.mrf.mxu0
        %v1087 = vadd.f32 %v1038, %v1086
        %1088 = vmatmul.bf16.gmra.mxu0 %v558
        %v1089 = vpop.f32.mrf.mxu0
        %v1090 = vadd.f32 %v1041, %v1089
        %v1091 = vpop.f32.mrf.mxu0
        %v1092 = vadd.f32 %v1043, %v1091
        %1093 = vmatmul.bf16.gmra.mxu0 %v562
        %v1094 = vpop.f32.mrf.mxu0
        %v1095 = vadd.f32 %v1046, %v1094
        %v1096 = vpop.f32.mrf.mxu0
        %v1097 = vadd.f32 %v1048, %v1096
        %1098 = vmatmul.bf16.gmra.mxu0 %v566
        %v1099 = vpop.f32.mrf.mxu0
        %v1100 = vadd.f32 %v1051, %v1099
        %v1101 = vpop.f32.mrf.mxu0
        %v1102 = vadd.f32 %v1053, %v1101
        %1103 = vmatmul.bf16.gmra.mxu0 %v570
        %v1104 = vpop.f32.mrf.mxu0
        %v1105 = vadd.f32 %v1056, %v1104
        %v1106 = vpop.f32.mrf.mxu0
        %v1107 = vadd.f32 %v1058, %v1106
        %1108 = vdwg.mxu0
        %1109 = vmatpush.bf16.msra.mxu0 %v896
        %1110 = vmatpush.bf16.msra.mxu0 %v894
        %1111 = vmatpush.bf16.msra.mxu0 %v892
        %1112 = vmatpush.bf16.msra.mxu0 %v890
        %1113 = vmatpush.bf16.msra.mxu0 %v888
        %1114 = vmatpush.bf16.msra.mxu0 %v886
        %1115 = vmatpush.bf16.msra.mxu0 %v884
        %1116 = vmatpush.bf16.msra.mxu0 %v882
        %1117 = vmatmul.bf16.gmra.mxu0 %v543
        %v1118 = vpop.f32.mrf.mxu0
        %v1119 = vadd.f32 %v1070, %v1118
        %v1120 = vpop.f32.mrf.mxu0
        %v1121 = vadd.f32 %v1072, %v1120
        %1122 = vmatmul.bf16.gmra.mxu0 %v547
        %v1123 = vpop.f32.mrf.mxu0
        %v1124 = vadd.f32 %v1075, %v1123
        %v1125 = vpop.f32.mrf.mxu0
        %v1126 = vadd.f32 %v1077, %v1125
        %1127 = vmatmul.bf16.gmra.mxu0 %v551
        %v1128 = vpop.f32.mrf.mxu0
        %v1129 = vadd.f32 %v1080, %v1128
        %v1130 = vpop.f32.mrf.mxu0
        %v1131 = vadd.f32 %v1082, %v1130
        %1132 = vmatmul.bf16.gmra.mxu0 %v555
        %v1133 = vpop.f32.mrf.mxu0
        %v1134 = vadd.f32 %v1085, %v1133
        %v1135 = vpop.f32.mrf.mxu0
        %v1136 = vadd.f32 %v1087, %v1135
        %1137 = vmatmul.bf16.gmra.mxu0 %v559
        %v1138 = vpop.f32.mrf.mxu0
        %v1139 = vadd.f32 %v1090, %v1138
        %v1140 = vpop.f32.mrf.mxu0
        %v1141 = vadd.f32 %v1092, %v1140
        %1142 = vmatmul.bf16.gmra.mxu0 %v563
        %v1143 = vpop.f32.mrf.mxu0
        %v1144 = vadd.f32 %v1095, %v1143
        %v1145 = vpop.f32.mrf.mxu0
        %v1146 = vadd.f32 %v1097, %v1145
        %1147 = vmatmul.bf16.gmra.mxu0 %v567
        %v1148 = vpop.f32.mrf.mxu0
        %v1149 = vadd.f32 %v1100, %v1148
        %v1150 = vpop.f32.mrf.mxu0
        %v1151 = vadd.f32 %v1102, %v1150
        %1152 = vmatmul.bf16.gmra.mxu0 %v571
        %v1153 = vpop.f32.mrf.mxu0
        %v1154 = vadd.f32 %v1105, %v1153
        %v1155 = vpop.f32.mrf.mxu0
        %v1156 = vadd.f32 %v1107, %v1155
        %1157 = vdwg.mxu0
        %1158 = vmatpush.bf16.msra.mxu0 %v849
        %1159 = vmatpush.bf16.msra.mxu0 %v847
        %1160 = vmatpush.bf16.msra.mxu0 %v845
        %1161 = vmatpush.bf16.msra.mxu0 %v843
        %1162 = vmatpush.bf16.msra.mxu0 %v841
        %1163 = vmatpush.bf16.msra.mxu0 %v839
        %1164 = vmatpush.bf16.msra.mxu0 %v837
        %1165 = vmatpush.bf16.msra.mxu0 %v835
        %1166 = vmatmul.bf16.gmra.mxu0 %v540
        %v1167 = vpop.f32.mrf.mxu0
        %v1168 = vadd.f32 %v639, %v1167
        %v1169 = vpop.f32.mrf.mxu0
        %v1170 = vadd.f32 %v639, %v1169
        %1171 = vmatmul.bf16.gmra.mxu0 %v544
        %v1172 = vpop.f32.mrf.mxu0
        %v1173 = vadd.f32 %v639, %v1172
        %v1174 = vpop.f32.mrf.mxu0
        %v1175 = vadd.f32 %v639, %v1174
        %1176 = vmatmul.bf16.gmra.mxu0 %v548
        %v1177 = vpop.f32.mrf.mxu0
        %v1178 = vadd.f32 %v639, %v1177
        %v1179 = vpop.f32.mrf.mxu0
        %v1180 = vadd.f32 %v639, %v1179
        %1181 = vmatmul.bf16.gmra.mxu0 %v552
        %v1182 = vpop.f32.mrf.mxu0
        %v1183 = vadd.f32 %v639, %v1182
        %v1184 = vpop.f32.mrf.mxu0
        %v1185 = vadd.f32 %v639, %v1184
        %1186 = vmatmul.bf16.gmra.mxu0 %v556
        %v1187 = vpop.f32.mrf.mxu0
        %v1188 = vadd.f32 %v639, %v1187
        %v1189 = vpop.f32.mrf.mxu0
        %v1190 = vadd.f32 %v639, %v1189
        %1191 = vmatmul.bf16.gmra.mxu0 %v560
        %v1192 = vpop.f32.mrf.mxu0
        %v1193 = vadd.f32 %v639, %v1192
        %v1194 = vpop.f32.mrf.mxu0
        %v1195 = vadd.f32 %v639, %v1194
        %1196 = vmatmul.bf16.gmra.mxu0 %v564
        %v1197 = vpop.f32.mrf.mxu0
        %v1198 = vadd.f32 %v639, %v1197
        %v1199 = vpop.f32.mrf.mxu0
        %v1200 = vadd.f32 %v639, %v1199
        %1201 = vmatmul.bf16.gmra.mxu0 %v568
        %v1202 = vpop.f32.mrf.mxu0
        %v1203 = vadd.f32 %v639, %v1202
        %v1204 = vpop.f32.mrf.mxu0
        %v1205 = vadd.f32 %v639, %v1204
        %1206 = vdwg.mxu0
        %1207 = vmatpush.bf16.msra.mxu0 %v865
        %1208 = vmatpush.bf16.msra.mxu0 %v863
        %1209 = vmatpush.bf16.msra.mxu0 %v861
        %1210 = vmatpush.bf16.msra.mxu0 %v859
        %1211 = vmatpush.bf16.msra.mxu0 %v857
        %1212 = vmatpush.bf16.msra.mxu0 %v855
        %1213 = vmatpush.bf16.msra.mxu0 %v853
        %1214 = vmatpush.bf16.msra.mxu0 %v851
        %1215 = vmatmul.bf16.gmra.mxu0 %v541
        %v1216 = vpop.f32.mrf.mxu0
        %v1217 = vadd.f32 %v1168, %v1216
        %v1218 = vpop.f32.mrf.mxu0
        %v1219 = vadd.f32 %v1170, %v1218
        %1220 = vmatmul.bf16.gmra.mxu0 %v545
        %v1221 = vpop.f32.mrf.mxu0
        %v1222 = vadd.f32 %v1173, %v1221
        %v1223 = vpop.f32.mrf.mxu0
        %v1224 = vadd.f32 %v1175, %v1223
        %1225 = vmatmul.bf16.gmra.mxu0 %v549
        %v1226 = vpop.f32.mrf.mxu0
        %v1227 = vadd.f32 %v1178, %v1226
        %v1228 = vpop.f32.mrf.mxu0
        %v1229 = vadd.f32 %v1180, %v1228
        %1230 = vmatmul.bf16.gmra.mxu0 %v553
        %v1231 = vpop.f32.mrf.mxu0
        %v1232 = vadd.f32 %v1183, %v1231
        %v1233 = vpop.f32.mrf.mxu0
        %v1234 = vadd.f32 %v1185, %v1233
        %1235 = vmatmul.bf16.gmra.mxu0 %v557
        %v1236 = vpop.f32.mrf.mxu0
        %v1237 = vadd.f32 %v1188, %v1236
        %v1238 = vpop.f32.mrf.mxu0
        %v1239 = vadd.f32 %v1190, %v1238
        %1240 = vmatmul.bf16.gmra.mxu0 %v561
        %v1241 = vpop.f32.mrf.mxu0
        %v1242 = vadd.f32 %v1193, %v1241
        %v1243 = vpop.f32.mrf.mxu0
        %v1244 = vadd.f32 %v1195, %v1243
        %1245 = vmatmul.bf16.gmra.mxu0 %v565
        %v1246 = vpop.f32.mrf.mxu0
        %v1247 = vadd.f32 %v1198, %v1246
        %v1248 = vpop.f32.mrf.mxu0
        %v1249 = vadd.f32 %v1200, %v1248
        %1250 = vmatmul.bf16.gmra.mxu0 %v569
        %v1251 = vpop.f32.mrf.mxu0
        %v1252 = vadd.f32 %v1203, %v1251
        %v1253 = vpop.f32.mrf.mxu0
        %v1254 = vadd.f32 %v1205, %v1253
        %1255 = vdwg.mxu0
        %1256 = vmatpush.bf16.msra.mxu0 %v881
        %1257 = vmatpush.bf16.msra.mxu0 %v879
        %1258 = vmatpush.bf16.msra.mxu0 %v877
        %1259 = vmatpush.bf16.msra.mxu0 %v875
        %1260 = vmatpush.bf16.msra.mxu0 %v873
        %1261 = vmatpush.bf16.msra.mxu0 %v871
        %1262 = vmatpush.bf16.msra.mxu0 %v869
        %1263 = vmatpush.bf16.msra.mxu0 %v867
        %1264 = vmatmul.bf16.gmra.mxu0 %v542
        %v1265 = vpop.f32.mrf.mxu0
        %v1266 = vadd.f32 %v1217, %v1265
        %v1267 = vpop.f32.mrf.mxu0
        %v1268 = vadd.f32 %v1219, %v1267
        %1269 = vmatmul.bf16.gmra.mxu0 %v546
        %v1270 = vpop.f32.mrf.mxu0
        %v1271 = vadd.f32 %v1222, %v1270
        %v1272 = vpop.f32.mrf.mxu0
        %v1273 = vadd.f32 %v1224, %v1272
        %1274 = vmatmul.bf16.gmra.mxu0 %v550
        %v1275 = vpop.f32.mrf.mxu0
        %v1276 = vadd.f32 %v1227, %v1275
        %v1277 = vpop.f32.mrf.mxu0
        %v1278 = vadd.f32 %v1229, %v1277
        %1279 = vmatmul.bf16.gmra.mxu0 %v554
        %v1280 = vpop.f32.mrf.mxu0
        %v1281 = vadd.f32 %v1232, %v1280
        %v1282 = vpop.f32.mrf.mxu0
        %v1283 = vadd.f32 %v1234, %v1282
        %1284 = vmatmul.bf16.gmra.mxu0 %v558
        %v1285 = vpop.f32.mrf.mxu0
        %v1286 = vadd.f32 %v1237, %v1285
        %v1287 = vpop.f32.mrf.mxu0
        %v1288 = vadd.f32 %v1239, %v1287
        %1289 = vmatmul.bf16.gmra.mxu0 %v562
        %v1290 = vpop.f32.mrf.mxu0
        %v1291 = vadd.f32 %v1242, %v1290
        %v1292 = vpop.f32.mrf.mxu0
        %v1293 = vadd.f32 %v1244, %v1292
        %1294 = vmatmul.bf16.gmra.mxu0 %v566
        %v1295 = vpop.f32.mrf.mxu0
        %v1296 = vadd.f32 %v1247, %v1295
        %v1297 = vpop.f32.mrf.mxu0
        %v1298 = vadd.f32 %v1249, %v1297
        %1299 = vmatmul.bf16.gmra.mxu0 %v570
        %v1300 = vpop.f32.mrf.mxu0
        %v1301 = vadd.f32 %v1252, %v1300
        %v1302 = vpop.f32.mrf.mxu0
        %v1303 = vadd.f32 %v1254, %v1302
        %1304 = vdwg.mxu0
        %1305 = vmatpush.bf16.msra.mxu0 %v897
        %1306 = vmatpush.bf16.msra.mxu0 %v895
        %1307 = vmatpush.bf16.msra.mxu0 %v893
        %1308 = vmatpush.bf16.msra.mxu0 %v891
        %1309 = vmatpush.bf16.msra.mxu0 %v889
        %1310 = vmatpush.bf16.msra.mxu0 %v887
        %1311 = vmatpush.bf16.msra.mxu0 %v885
        %1312 = vmatpush.bf16.msra.mxu0 %v883
        %1313 = vmatmul.bf16.gmra.mxu0 %v543
        %v1314 = vpop.f32.mrf.mxu0
        %v1315 = vadd.f32 %v1266, %v1314
        %v1316 = vpop.f32.mrf.mxu0
        %v1317 = vadd.f32 %v1268, %v1316
        %1318 = vmatmul.bf16.gmra.mxu0 %v547
        %v1319 = vpop.f32.mrf.mxu0
        %v1320 = vadd.f32 %v1271, %v1319
        %v1321 = vpop.f32.mrf.mxu0
        %v1322 = vadd.f32 %v1273, %v1321
        %1323 = vmatmul.bf16.gmra.mxu0 %v551
        %v1324 = vpop.f32.mrf.mxu0
        %v1325 = vadd.f32 %v1276, %v1324
        %v1326 = vpop.f32.mrf.mxu0
        %v1327 = vadd.f32 %v1278, %v1326
        %1328 = vmatmul.bf16.gmra.mxu0 %v555
        %v1329 = vpop.f32.mrf.mxu0
        %v1330 = vadd.f32 %v1281, %v1329
        %v1331 = vpop.f32.mrf.mxu0
        %v1332 = vadd.f32 %v1283, %v1331
        %1333 = vmatmul.bf16.gmra.mxu0 %v559
        %v1334 = vpop.f32.mrf.mxu0
        %v1335 = vadd.f32 %v1286, %v1334
        %v1336 = vpop.f32.mrf.mxu0
        %v1337 = vadd.f32 %v1288, %v1336
        %1338 = vmatmul.bf16.gmra.mxu0 %v563
        %v1339 = vpop.f32.mrf.mxu0
        %v1340 = vadd.f32 %v1291, %v1339
        %v1341 = vpop.f32.mrf.mxu0
        %v1342 = vadd.f32 %v1293, %v1341
        %1343 = vmatmul.bf16.gmra.mxu0 %v567
        %v1344 = vpop.f32.mrf.mxu0
        %v1345 = vadd.f32 %v1296, %v1344
        %v1346 = vpop.f32.mrf.mxu0
        %v1347 = vadd.f32 %v1298, %v1346
        %1348 = vmatmul.bf16.gmra.mxu0 %v571
        %v1349 = vpop.f32.mrf.mxu0
        %v1350 = vadd.f32 %v1301, %v1349
        %v1351 = vpop.f32.mrf.mxu0
        %v1352 = vadd.f32 %v1303, %v1351
        %1353 = vdwg.mxu0
        %v1354 = vmax.f32 %v1119, 0.0
        %v1355 = vmax.f32 %v1315, 0.0
        %v1356 = vmax.f32 %v1121, 0.0
        %v1357 = vmax.f32 %v1317, 0.0
        %v1358 = vmax.f32 %v1124, 0.0
        %v1359 = vmax.f32 %v1320, 0.0
        %v1360 = vmax.f32 %v1126, 0.0
        %v1361 = vmax.f32 %v1322, 0.0
        %v1362 = vmax.f32 %v1129, 0.0
        %v1363 = vmax.f32 %v1325, 0.0
        %v1364 = vmax.f32 %v1131, 0.0
        %v1365 = vmax.f32 %v1327, 0.0
        %v1366 = vmax.f32 %v1134, 0.0
        %v1367 = vmax.f32 %v1330, 0.0
        %v1368 = vmax.f32 %v1136, 0.0
        %v1369 = vmax.f32 %v1332, 0.0
        %v1370 = vmax.f32 %v1139, 0.0
        %v1371 = vmax.f32 %v1335, 0.0
        %v1372 = vmax.f32 %v1141, 0.0
        %v1373 = vmax.f32 %v1337, 0.0
        %v1374 = vmax.f32 %v1144, 0.0
        %v1375 = vmax.f32 %v1340, 0.0
        %v1376 = vmax.f32 %v1146, 0.0
        %v1377 = vmax.f32 %v1342, 0.0
        %v1378 = vmax.f32 %v1149, 0.0
        %v1379 = vmax.f32 %v1345, 0.0
        %v1380 = vmax.f32 %v1151, 0.0
        %v1381 = vmax.f32 %v1347, 0.0
        %v1382 = vmax.f32 %v1154, 0.0
        %v1383 = vmax.f32 %v1350, 0.0
        %v1384 = vmax.f32 %v1156, 0.0
        %v1385 = vmax.f32 %v1352, 0.0
        %v1386 = vpack.c.bf16 %v1356, %v1354
        %v1387 = vpack.c.bf16 %v1357, %v1355
        %v1388 = vpack.c.bf16 %v1360, %v1358
        %v1389 = vpack.c.bf16 %v1361, %v1359
        %v1390 = vpack.c.bf16 %v1364, %v1362
        %v1391 = vpack.c.bf16 %v1365, %v1363
        %v1392 = vpack.c.bf16 %v1368, %v1366
        %v1393 = vpack.c.bf16 %v1369, %v1367
        %v1394 = vpack.c.bf16 %v1372, %v1370
        %v1395 = vpack.c.bf16 %v1373, %v1371
        %v1396 = vpack.c.bf16 %v1376, %v1374
        %v1397 = vpack.c.bf16 %v1377, %v1375
        %v1398 = vpack.c.bf16 %v1380, %v1378
        %v1399 = vpack.c.bf16 %v1381, %v1379
        %v1400 = vpack.c.bf16 %v1384, %v1382
        %v1401 = vpack.c.bf16 %v1385, %v1383
        %v1402 = vld [vmem:[#allocation8] sm:$0xf]
        %v1403 = vld [vmem:[#allocation8 + $0x4] sm:$0xf]
        %v1404 = vld [vmem:[#allocation8 + $0x8] sm:$0xf]
        %v1405 = vld [vmem:[#allocation8 + $0xc] sm:$0xf]
        %v1406 = vld [vmem:[#allocation8 + $0x10] sm:$0xf]
        %v1407 = vld [vmem:[#allocation8 + $0x14] sm:$0xf]
        %v1408 = vld [vmem:[#allocation8 + $0x18] sm:$0xf]
        %v1409 = vld [vmem:[#allocation8 + $0x1c] sm:$0xf]
        %v1410 = vld [vmem:[#allocation8 + $0x20] sm:$0xf]
        %v1411 = vld [vmem:[#allocation8 + $0x24] sm:$0xf]
        %v1412 = vld [vmem:[#allocation8 + $0x28] sm:$0xf]
        %v1413 = vld [vmem:[#allocation8 + $0x2c] sm:$0xf]
        %v1414 = vld [vmem:[#allocation8 + $0x30] sm:$0xf]
        %v1415 = vld [vmem:[#allocation8 + $0x34] sm:$0xf]
        %v1416 = vld [vmem:[#allocation8 + $0x38] sm:$0xf]
        %v1417 = vld [vmem:[#allocation8 + $0x3c] sm:$0xf]
        %v1418 = vld [vmem:[#allocation8 + $0x40] sm:$0xf]
        %v1419 = vld [vmem:[#allocation8 + $0x44] sm:$0xf]
        %v1420 = vld [vmem:[#allocation8 + $0x48] sm:$0xf]
        %v1421 = vld [vmem:[#allocation8 + $0x4c] sm:$0xf]
        %v1422 = vld [vmem:[#allocation8 + $0x50] sm:$0xf]
        %v1423 = vld [vmem:[#allocation8 + $0x54] sm:$0xf]
        %v1424 = vld [vmem:[#allocation8 + $0x58] sm:$0xf]
        %v1425 = vld [vmem:[#allocation8 + $0x5c] sm:$0xf]
        %v1426 = vld [vmem:[#allocation8 + $0x60] sm:$0xf]
        %v1427 = vld [vmem:[#allocation8 + $0x64] sm:$0xf]
        %v1428 = vld [vmem:[#allocation8 + $0x68] sm:$0xf]
        %v1429 = vld [vmem:[#allocation8 + $0x6c] sm:$0xf]
        %v1430 = vld [vmem:[#allocation8 + $0x70] sm:$0xf]
        %v1431 = vld [vmem:[#allocation8 + $0x74] sm:$0xf]
        %v1432 = vld [vmem:[#allocation8 + $0x78] sm:$0xf]
        %v1433 = vld [vmem:[#allocation8 + $0x7c] sm:$0xf]
        %v1434 = vld [vmem:[%s4] sm:$0x1]
        %v1436 = vperm.slane %v1434, 0
        %v1470 = vunpack.c.l.b16 %v1402
        %v1471 = vunpack.c.l.b16 %v1403
        %v1472 = vunpack.c.l.b16 %v1404
        %v1473 = vunpack.c.l.b16 %v1405
        %v1474 = vunpack.c.l.b16 %v1406
        %v1475 = vunpack.c.l.b16 %v1407
        %v1476 = vunpack.c.l.b16 %v1408
        %v1477 = vunpack.c.l.b16 %v1409
        %v1478 = vunpack.c.l.b16 %v1410
        %v1479 = vunpack.c.l.b16 %v1411
        %v1480 = vunpack.c.l.b16 %v1412
        %v1481 = vunpack.c.l.b16 %v1413
        %v1482 = vunpack.c.l.b16 %v1414
        %v1483 = vunpack.c.l.b16 %v1415
        %v1484 = vunpack.c.l.b16 %v1416
        %v1485 = vunpack.c.l.b16 %v1417
        %v1486 = vunpack.c.l.b16 %v1418
        %v1487 = vunpack.c.l.b16 %v1419
        %v1488 = vunpack.c.l.b16 %v1420
        %v1489 = vunpack.c.l.b16 %v1421
        %v1490 = vunpack.c.l.b16 %v1422
        %v1491 = vunpack.c.l.b16 %v1423
        %v1492 = vunpack.c.l.b16 %v1424
        %v1493 = vunpack.c.l.b16 %v1425
        %v1494 = vunpack.c.l.b16 %v1426
        %v1495 = vunpack.c.l.b16 %v1427
        %v1496 = vunpack.c.l.b16 %v1428
        %v1497 = vunpack.c.l.b16 %v1429
        %v1498 = vunpack.c.l.b16 %v1430
        %v1499 = vunpack.c.l.b16 %v1431
        %v1500 = vunpack.c.l.b16 %v1432
        %v1501 = vunpack.c.l.b16 %v1433
        %v1502 = vpack.c.b16 %v1471, %v1470
        %v1503 = vpack.c.b16 %v1473, %v1472
        %v1504 = vpack.c.b16 %v1475, %v1474
        %v1505 = vpack.c.b16 %v1477, %v1476
        %v1506 = vpack.c.b16 %v1479, %v1478
        %v1507 = vpack.c.b16 %v1481, %v1480
        %v1508 = vpack.c.b16 %v1483, %v1482
        %v1509 = vpack.c.b16 %v1485, %v1484
        %v1510 = vpack.c.b16 %v1487, %v1486
        %v1511 = vpack.c.b16 %v1489, %v1488
        %v1512 = vpack.c.b16 %v1491, %v1490
        %v1513 = vpack.c.b16 %v1493, %v1492
        %v1514 = vpack.c.b16 %v1495, %v1494
        %v1515 = vpack.c.b16 %v1497, %v1496
        %v1516 = vpack.c.b16 %v1499, %v1498
        %v1517 = vpack.c.b16 %v1501, %v1500
        %1534 = vmatpush.bf16.msra.mxu0 %v1509
        %1535 = vmatpush.bf16.msra.mxu0 %v1508
        %1536 = vmatpush.bf16.msra.mxu0 %v1507
        %1537 = vmatpush.bf16.msra.mxu0 %v1506
        %1538 = vmatpush.bf16.msra.mxu0 %v1505
        %1539 = vmatpush.bf16.msra.mxu0 %v1504
        %1540 = vmatpush.bf16.msra.mxu0 %v1503
        %1541 = vmatpush.bf16.msra.mxu0 %v1502
        %1542 = vmatmul.bf16.gmra.mxu0 %v1386
        %v1543 = vpop.f32.mrf.mxu0
        %v1544 = vadd.f32 %v1436, %v1543
        %v1545 = vpop.f32.mrf.mxu0
        %v1546 = vadd.f32 %v1436, %v1545
        %1547 = vmatmul.bf16.gmra.mxu0 %v1388
        %v1548 = vpop.f32.mrf.mxu0
        %v1549 = vadd.f32 %v1436, %v1548
        %v1550 = vpop.f32.mrf.mxu0
        %v1551 = vadd.f32 %v1436, %v1550
        %1552 = vmatmul.bf16.gmra.mxu0 %v1390
        %v1553 = vpop.f32.mrf.mxu0
        %v1554 = vadd.f32 %v1436, %v1553
        %v1555 = vpop.f32.mrf.mxu0
        %v1556 = vadd.f32 %v1436, %v1555
        %1557 = vmatmul.bf16.gmra.mxu0 %v1392
        %v1558 = vpop.f32.mrf.mxu0
        %v1559 = vadd.f32 %v1436, %v1558
        %v1560 = vpop.f32.mrf.mxu0
        %v1561 = vadd.f32 %v1436, %v1560
        %1562 = vmatmul.bf16.gmra.mxu0 %v1394
        %v1563 = vpop.f32.mrf.mxu0
        %v1564 = vadd.f32 %v1436, %v1563
        %v1565 = vpop.f32.mrf.mxu0
        %v1566 = vadd.f32 %v1436, %v1565
        %1567 = vmatmul.bf16.gmra.mxu0 %v1396
        %v1568 = vpop.f32.mrf.mxu0
        %v1569 = vadd.f32 %v1436, %v1568
        %v1570 = vpop.f32.mrf.mxu0
        %v1571 = vadd.f32 %v1436, %v1570
        %1572 = vmatmul.bf16.gmra.mxu0 %v1398
        %v1573 = vpop.f32.mrf.mxu0
        %v1574 = vadd.f32 %v1436, %v1573
        %v1575 = vpop.f32.mrf.mxu0
        %v1576 = vadd.f32 %v1436, %v1575
        %1577 = vmatmul.bf16.gmra.mxu0 %v1400
        %v1578 = vpop.f32.mrf.mxu0
        %v1579 = vadd.f32 %v1436, %v1578
        %v1580 = vpop.f32.mrf.mxu0
        %v1581 = vadd.f32 %v1436, %v1580
        %1582 = vdwg.mxu0
        %1583 = vmatpush.bf16.msra.mxu0 %v1517
        %1584 = vmatpush.bf16.msra.mxu0 %v1516
        %1585 = vmatpush.bf16.msra.mxu0 %v1515
        %1586 = vmatpush.bf16.msra.mxu0 %v1514
        %1587 = vmatpush.bf16.msra.mxu0 %v1513
        %1588 = vmatpush.bf16.msra.mxu0 %v1512
        %1589 = vmatpush.bf16.msra.mxu0 %v1511
        %1590 = vmatpush.bf16.msra.mxu0 %v1510
        %1591 = vmatmul.bf16.gmra.mxu0 %v1387
        %v1592 = vpop.f32.mrf.mxu0
        %v1593 = vadd.f32 %v1544, %v1592
        %v1594 = vpop.f32.mrf.mxu0
        %v1595 = vadd.f32 %v1546, %v1594
        %1596 = vmatmul.bf16.gmra.mxu0 %v1389
        %v1597 = vpop.f32.mrf.mxu0
        %v1598 = vadd.f32 %v1549, %v1597
        %v1599 = vpop.f32.mrf.mxu0
        %v1600 = vadd.f32 %v1551, %v1599
        %1601 = vmatmul.bf16.gmra.mxu0 %v1391
        %v1602 = vpop.f32.mrf.mxu0
        %v1603 = vadd.f32 %v1554, %v1602
        %v1604 = vpop.f32.mrf.mxu0
        %v1605 = vadd.f32 %v1556, %v1604
        %1606 = vmatmul.bf16.gmra.mxu0 %v1393
        %v1607 = vpop.f32.mrf.mxu0
        %v1608 = vadd.f32 %v1559, %v1607
        %v1609 = vpop.f32.mrf.mxu0
        %v1610 = vadd.f32 %v1561, %v1609
        %1611 = vmatmul.bf16.gmra.mxu0 %v1395
        %v1612 = vpop.f32.mrf.mxu0
        %v1613 = vadd.f32 %v1564, %v1612
        %v1614 = vpop.f32.mrf.mxu0
        %v1615 = vadd.f32 %v1566, %v1614
        %1616 = vmatmul.bf16.gmra.mxu0 %v1397
        %v1617 = vpop.f32.mrf.mxu0
        %v1618 = vadd.f32 %v1569, %v1617
        %v1619 = vpop.f32.mrf.mxu0
        %v1620 = vadd.f32 %v1571, %v1619
        %1621 = vmatmul.bf16.gmra.mxu0 %v1399
        %v1622 = vpop.f32.mrf.mxu0
        %v1623 = vadd.f32 %v1574, %v1622
        %v1624 = vpop.f32.mrf.mxu0
        %v1625 = vadd.f32 %v1576, %v1624
        %1626 = vmatmul.bf16.gmra.mxu0 %v1401
        %v1627 = vpop.f32.mrf.mxu0
        %v1628 = vadd.f32 %v1579, %v1627
        %v1629 = vpop.f32.mrf.mxu0
        %v1630 = vadd.f32 %v1581, %v1629
        %1631 = vdwg.mxu0
        %v1632 = vpack.c.bf16 %v1595, %v1593
        %v1633 = vpack.c.bf16 %v1600, %v1598
        %v1634 = vpack.c.bf16 %v1605, %v1603
        %v1635 = vpack.c.bf16 %v1610, %v1608
        %v1636 = vpack.c.bf16 %v1615, %v1613
        %v1637 = vpack.c.bf16 %v1620, %v1618
        %v1638 = vpack.c.bf16 %v1625, %v1623
        %v1639 = vpack.c.bf16 %v1630, %v1628
        %v1640 = vld [vmem:[#allocation10] sm:$0xff]
        %v1641 = vld [vmem:[#allocation10 + $0x8] sm:$0xff]
        %v1642 = vld [vmem:[#allocation10 + $0x10] sm:$0xff]
        %v1643 = vld [vmem:[#allocation10 + $0x18] sm:$0xff]
        %v1644 = vld [vmem:[#allocation10 + $0x20] sm:$0xff]
        %v1645 = vld [vmem:[#allocation10 + $0x28] sm:$0xff]
        %v1646 = vld [vmem:[#allocation10 + $0x30] sm:$0xff]
        %v1647 = vld [vmem:[#allocation10 + $0x38] sm:$0xff]
        %v1648 = vld [vmem:[#allocation10 + $0x40] sm:$0xff]
        %v1649 = vld [vmem:[#allocation10 + $0x48] sm:$0xff]
        %v1650 = vld [vmem:[#allocation10 + $0x50] sm:$0xff]
        %v1651 = vld [vmem:[#allocation10 + $0x58] sm:$0xff]
        %v1652 = vld [vmem:[#allocation10 + $0x60] sm:$0xff]
        %v1653 = vld [vmem:[#allocation10 + $0x68] sm:$0xff]
        %v1654 = vld [vmem:[#allocation10 + $0x70] sm:$0xff]
        %v1655 = vld [vmem:[#allocation10 + $0x78] sm:$0xff]
        %v1656 = vld [vmem:[%s6] sm:$0x3]
        %v1658 = vperm.slane %v1656, 0
        %v1659 = vperm.slane %v1656, 1
        %v1678 = vunpack.c.l.b16 %v1640
        %v1679 = vunpack.c.h.b16 %v1640
        %v1680 = vunpack.c.l.b16 %v1641
        %v1681 = vunpack.c.h.b16 %v1641
        %v1682 = vunpack.c.l.b16 %v1642
        %v1683 = vunpack.c.h.b16 %v1642
        %v1684 = vunpack.c.l.b16 %v1643
        %v1685 = vunpack.c.h.b16 %v1643
        %v1686 = vunpack.c.l.b16 %v1644
        %v1687 = vunpack.c.h.b16 %v1644
        %v1688 = vunpack.c.l.b16 %v1645
        %v1689 = vunpack.c.h.b16 %v1645
        %v1690 = vunpack.c.l.b16 %v1646
        %v1691 = vunpack.c.h.b16 %v1646
        %v1692 = vunpack.c.l.b16 %v1647
        %v1693 = vunpack.c.h.b16 %v1647
        %v1694 = vunpack.c.l.b16 %v1648
        %v1695 = vunpack.c.h.b16 %v1648
        %v1696 = vunpack.c.l.b16 %v1649
        %v1697 = vunpack.c.h.b16 %v1649
        %v1698 = vunpack.c.l.b16 %v1650
        %v1699 = vunpack.c.h.b16 %v1650
        %v1700 = vunpack.c.l.b16 %v1651
        %v1701 = vunpack.c.h.b16 %v1651
        %v1702 = vunpack.c.l.b16 %v1652
        %v1703 = vunpack.c.h.b16 %v1652
        %v1704 = vunpack.c.l.b16 %v1653
        %v1705 = vunpack.c.h.b16 %v1653
        %v1706 = vunpack.c.l.b16 %v1654
        %v1707 = vunpack.c.h.b16 %v1654
        %v1708 = vunpack.c.l.b16 %v1655
        %v1709 = vunpack.c.h.b16 %v1655
        %v1710 = vpack.c.b16 %v1680, %v1678
        %v1711 = vpack.c.b16 %v1681, %v1679
        %v1712 = vpack.c.b16 %v1684, %v1682
        %v1713 = vpack.c.b16 %v1685, %v1683
        %v1714 = vpack.c.b16 %v1688, %v1686
        %v1715 = vpack.c.b16 %v1689, %v1687
        %v1716 = vpack.c.b16 %v1692, %v1690
        %v1717 = vpack.c.b16 %v1693, %v1691
        %v1718 = vpack.c.b16 %v1696, %v1694
        %v1719 = vpack.c.b16 %v1697, %v1695
        %v1720 = vpack.c.b16 %v1700, %v1698
        %v1721 = vpack.c.b16 %v1701, %v1699
        %v1722 = vpack.c.b16 %v1704, %v1702
        %v1723 = vpack.c.b16 %v1705, %v1703
        %v1724 = vpack.c.b16 %v1708, %v1706
        %v1725 = vpack.c.b16 %v1709, %v1707
        %1742 = vmatpush.bf16.msra.mxu0 %v1724
        %1743 = vmatpush.bf16.msra.mxu0 %v1722
        %1744 = vmatpush.bf16.msra.mxu0 %v1720
        %1745 = vmatpush.bf16.msra.mxu0 %v1718
        %1746 = vmatpush.bf16.msra.mxu0 %v1716
        %1747 = vmatpush.bf16.msra.mxu0 %v1714
        %1748 = vmatpush.bf16.msra.mxu0 %v1712
        %1749 = vmatpush.bf16.msra.mxu0 %v1710
        %1750 = vmatmul.bf16.gmra.mxu0 %v1632
        %v1751 = vpop.f32.mrf.mxu0
        %v1752 = vadd.f32 %v1658, %v1751
        %v1753 = vpop.f32.mrf.mxu0
        %v1754 = vadd.f32 %v1658, %v1753
        %1755 = vmatmul.bf16.gmra.mxu0 %v1633
        %v1756 = vpop.f32.mrf.mxu0
        %v1757 = vadd.f32 %v1658, %v1756
        %v1758 = vpop.f32.mrf.mxu0
        %v1759 = vadd.f32 %v1658, %v1758
        %1760 = vmatmul.bf16.gmra.mxu0 %v1634
        %v1761 = vpop.f32.mrf.mxu0
        %v1762 = vadd.f32 %v1658, %v1761
        %v1763 = vpop.f32.mrf.mxu0
        %v1764 = vadd.f32 %v1658, %v1763
        %1765 = vmatmul.bf16.gmra.mxu0 %v1635
        %v1766 = vpop.f32.mrf.mxu0
        %v1767 = vadd.f32 %v1658, %v1766
        %v1768 = vpop.f32.mrf.mxu0
        %v1769 = vadd.f32 %v1658, %v1768
        %1770 = vmatmul.bf16.gmra.mxu0 %v1636
        %v1771 = vpop.f32.mrf.mxu0
        %v1772 = vadd.f32 %v1658, %v1771
        %v1773 = vpop.f32.mrf.mxu0
        %v1774 = vadd.f32 %v1658, %v1773
        %1775 = vmatmul.bf16.gmra.mxu0 %v1637
        %v1776 = vpop.f32.mrf.mxu0
        %v1777 = vadd.f32 %v1658, %v1776
        %v1778 = vpop.f32.mrf.mxu0
        %v1779 = vadd.f32 %v1658, %v1778
        %1780 = vmatmul.bf16.gmra.mxu0 %v1638
        %v1781 = vpop.f32.mrf.mxu0
        %v1782 = vadd.f32 %v1658, %v1781
        %v1783 = vpop.f32.mrf.mxu0
        %v1784 = vadd.f32 %v1658, %v1783
        %1785 = vmatmul.bf16.gmra.mxu0 %v1639
        %v1786 = vpop.f32.mrf.mxu0
        %v1787 = vadd.f32 %v1658, %v1786
        %v1788 = vpop.f32.mrf.mxu0
        %v1789 = vadd.f32 %v1658, %v1788
        %1790 = vdwg.mxu0
        %1791 = vmatpush.bf16.msra.mxu0 %v1725
        %1792 = vmatpush.bf16.msra.mxu0 %v1723
        %1793 = vmatpush.bf16.msra.mxu0 %v1721
        %1794 = vmatpush.bf16.msra.mxu0 %v1719
        %1795 = vmatpush.bf16.msra.mxu0 %v1717
        %1796 = vmatpush.bf16.msra.mxu0 %v1715
        %1797 = vmatpush.bf16.msra.mxu0 %v1713
        %1798 = vmatpush.bf16.msra.mxu0 %v1711
        %1799 = vmatmul.bf16.gmra.mxu0 %v1632
        %v1800 = vpop.f32.mrf.mxu0
        %v1801 = vadd.f32 %v1659, %v1800
        %v1802 = vpop.f32.mrf.mxu0
        %v1803 = vadd.f32 %v1659, %v1802
        %1804 = vmatmul.bf16.gmra.mxu0 %v1633
        %v1805 = vpop.f32.mrf.mxu0
        %v1806 = vadd.f32 %v1659, %v1805
        %v1807 = vpop.f32.mrf.mxu0
        %v1808 = vadd.f32 %v1659, %v1807
        %1809 = vmatmul.bf16.gmra.mxu0 %v1634
        %v1810 = vpop.f32.mrf.mxu0
        %v1811 = vadd.f32 %v1659, %v1810
        %v1812 = vpop.f32.mrf.mxu0
        %v1813 = vadd.f32 %v1659, %v1812
        %1814 = vmatmul.bf16.gmra.mxu0 %v1635
        %v1815 = vpop.f32.mrf.mxu0
        %v1816 = vadd.f32 %v1659, %v1815
        %v1817 = vpop.f32.mrf.mxu0
        %v1818 = vadd.f32 %v1659, %v1817
        %1819 = vmatmul.bf16.gmra.mxu0 %v1636
        %v1820 = vpop.f32.mrf.mxu0
        %v1821 = vadd.f32 %v1659, %v1820
        %v1822 = vpop.f32.mrf.mxu0
        %v1823 = vadd.f32 %v1659, %v1822
        %1824 = vmatmul.bf16.gmra.mxu0 %v1637
        %v1825 = vpop.f32.mrf.mxu0
        %v1826 = vadd.f32 %v1659, %v1825
        %v1827 = vpop.f32.mrf.mxu0
        %v1828 = vadd.f32 %v1659, %v1827
        %1829 = vmatmul.bf16.gmra.mxu0 %v1638
        %v1830 = vpop.f32.mrf.mxu0
        %v1831 = vadd.f32 %v1659, %v1830
        %v1832 = vpop.f32.mrf.mxu0
        %v1833 = vadd.f32 %v1659, %v1832
        %1834 = vmatmul.bf16.gmra.mxu0 %v1639
        %v1835 = vpop.f32.mrf.mxu0
        %v1836 = vadd.f32 %v1659, %v1835
        %v1837 = vpop.f32.mrf.mxu0
        %v1838 = vadd.f32 %v1659, %v1837
        %1839 = vdwg.mxu0
        %v1840 = vmax.f32 %v1752, 0.0
        %v1841 = vmax.f32 %v1801, 0.0
        %v1842 = vmax.f32 %v1754, 0.0
        %v1843 = vmax.f32 %v1803, 0.0
        %v1844 = vmax.f32 %v1757, 0.0
        %v1845 = vmax.f32 %v1806, 0.0
        %v1846 = vmax.f32 %v1759, 0.0
        %v1847 = vmax.f32 %v1808, 0.0
        %v1848 = vmax.f32 %v1762, 0.0
        %v1849 = vmax.f32 %v1811, 0.0
        %v1850 = vmax.f32 %v1764, 0.0
        %v1851 = vmax.f32 %v1813, 0.0
        %v1852 = vmax.f32 %v1767, 0.0
        %v1853 = vmax.f32 %v1816, 0.0
        %v1854 = vmax.f32 %v1769, 0.0
        %v1855 = vmax.f32 %v1818, 0.0
        %v1856 = vmax.f32 %v1772, 0.0
        %v1857 = vmax.f32 %v1821, 0.0
        %v1858 = vmax.f32 %v1774, 0.0
        %v1859 = vmax.f32 %v1823, 0.0
        %v1860 = vmax.f32 %v1777, 0.0
        %v1861 = vmax.f32 %v1826, 0.0
        %v1862 = vmax.f32 %v1779, 0.0
        %v1863 = vmax.f32 %v1828, 0.0
        %v1864 = vmax.f32 %v1782, 0.0
        %v1865 = vmax.f32 %v1831, 0.0
        %v1866 = vmax.f32 %v1784, 0.0
        %v1867 = vmax.f32 %v1833, 0.0
        %v1868 = vmax.f32 %v1787, 0.0
        %v1869 = vmax.f32 %v1836, 0.0
        %v1870 = vmax.f32 %v1789, 0.0
        %v1871 = vmax.f32 %v1838, 0.0
        %v1872 = vpack.c.bf16 %v1842, %v1840
        %v1873 = vpack.c.bf16 %v1843, %v1841
        %v1874 = vpack.c.bf16 %v1846, %v1844
        %v1875 = vpack.c.bf16 %v1847, %v1845
        %v1876 = vpack.c.bf16 %v1850, %v1848
        %v1877 = vpack.c.bf16 %v1851, %v1849
        %v1878 = vpack.c.bf16 %v1854, %v1852
        %v1879 = vpack.c.bf16 %v1855, %v1853
        %v1880 = vpack.c.bf16 %v1858, %v1856
        %v1881 = vpack.c.bf16 %v1859, %v1857
        %v1882 = vpack.c.bf16 %v1862, %v1860
        %v1883 = vpack.c.bf16 %v1863, %v1861
        %v1884 = vpack.c.bf16 %v1866, %v1864
        %v1885 = vpack.c.bf16 %v1867, %v1865
        %v1886 = vpack.c.bf16 %v1870, %v1868
        %v1887 = vpack.c.bf16 %v1871, %v1869
        %v1888 = vld [vmem:[#allocation11] sm:$0xff]
        %v1889 = vld [vmem:[#allocation11 + $0x8] sm:$0xff]
        %v1890 = vld [vmem:[#allocation11 + $0x10] sm:$0xff]
        %v1891 = vld [vmem:[#allocation11 + $0x18] sm:$0xff]
        %v1892 = vld [vmem:[#allocation11 + $0x20] sm:$0xff]
        %v1893 = vld [vmem:[#allocation11 + $0x28] sm:$0xff]
        %v1894 = vld [vmem:[#allocation11 + $0x30] sm:$0xff]
        %v1895 = vld [vmem:[#allocation11 + $0x38] sm:$0xff]
        %v1896 = vld [vmem:[#allocation11 + $0x40] sm:$0xff]
        %v1897 = vld [vmem:[#allocation11 + $0x48] sm:$0xff]
        %v1898 = vld [vmem:[#allocation11 + $0x50] sm:$0xff]
        %v1899 = vld [vmem:[#allocation11 + $0x58] sm:$0xff]
        %v1900 = vld [vmem:[#allocation11 + $0x60] sm:$0xff]
        %v1901 = vld [vmem:[#allocation11 + $0x68] sm:$0xff]
        %v1902 = vld [vmem:[#allocation11 + $0x70] sm:$0xff]
        %v1903 = vld [vmem:[#allocation11 + $0x78] sm:$0xff]
        %v1904 = vld [vmem:[#allocation11 + $0x80] sm:$0xff]
        %v1905 = vld [vmem:[#allocation11 + $0x88] sm:$0xff]
        %v1906 = vld [vmem:[#allocation11 + $0x90] sm:$0xff]
        %v1907 = vld [vmem:[#allocation11 + $0x98] sm:$0xff]
        %v1908 = vld [vmem:[#allocation11 + $0xa0] sm:$0xff]
        %v1909 = vld [vmem:[#allocation11 + $0xa8] sm:$0xff]
        %v1910 = vld [vmem:[#allocation11 + $0xb0] sm:$0xff]
        %v1911 = vld [vmem:[#allocation11 + $0xb8] sm:$0xff]
        %v1912 = vld [vmem:[#allocation11 + $0xc0] sm:$0xff]
        %v1913 = vld [vmem:[#allocation11 + $0xc8] sm:$0xff]
        %v1914 = vld [vmem:[#allocation11 + $0xd0] sm:$0xff]
        %v1915 = vld [vmem:[#allocation11 + $0xd8] sm:$0xff]
        %v1916 = vld [vmem:[#allocation11 + $0xe0] sm:$0xff]
        %v1917 = vld [vmem:[#allocation11 + $0xe8] sm:$0xff]
        %v1918 = vld [vmem:[#allocation11 + $0xf0] sm:$0xff]
        %v1919 = vld [vmem:[#allocation11 + $0xf8] sm:$0xff]
        %v1920 = vld [vmem:[#allocation11 + $0x100] sm:$0xff]
        %v1921 = vld [vmem:[#allocation11 + $0x108] sm:$0xff]
        %v1922 = vld [vmem:[#allocation11 + $0x110] sm:$0xff]
        %v1923 = vld [vmem:[#allocation11 + $0x118] sm:$0xff]
        %v1924 = vld [vmem:[#allocation11 + $0x120] sm:$0xff]
        %v1925 = vld [vmem:[#allocation11 + $0x128] sm:$0xff]
        %v1926 = vld [vmem:[#allocation11 + $0x130] sm:$0xff]
        %v1927 = vld [vmem:[#allocation11 + $0x138] sm:$0xff]
        %v1928 = vld [vmem:[#allocation11 + $0x140] sm:$0xff]
        %v1929 = vld [vmem:[#allocation11 + $0x148] sm:$0xff]
        %v1930 = vld [vmem:[#allocation11 + $0x150] sm:$0xff]
        %v1931 = vld [vmem:[#allocation11 + $0x158] sm:$0xff]
        %v1932 = vld [vmem:[#allocation11 + $0x160] sm:$0xff]
        %v1933 = vld [vmem:[#allocation11 + $0x168] sm:$0xff]
        %v1934 = vld [vmem:[#allocation11 + $0x170] sm:$0xff]
        %v1935 = vld [vmem:[#allocation11 + $0x178] sm:$0xff]
        %v1936 = vld [vmem:[#allocation11 + $0x180] sm:$0xff]
        %v1937 = vld [vmem:[#allocation11 + $0x188] sm:$0xff]
        %v1938 = vld [vmem:[#allocation11 + $0x190] sm:$0xff]
        %v1939 = vld [vmem:[#allocation11 + $0x198] sm:$0xff]
        %v1940 = vld [vmem:[#allocation11 + $0x1a0] sm:$0xff]
        %v1941 = vld [vmem:[#allocation11 + $0x1a8] sm:$0xff]
        %v1942 = vld [vmem:[#allocation11 + $0x1b0] sm:$0xff]
        %v1943 = vld [vmem:[#allocation11 + $0x1b8] sm:$0xff]
        %v1944 = vld [vmem:[#allocation11 + $0x1c0] sm:$0xff]
        %v1945 = vld [vmem:[#allocation11 + $0x1c8] sm:$0xff]
        %v1946 = vld [vmem:[#allocation11 + $0x1d0] sm:$0xff]
        %v1947 = vld [vmem:[#allocation11 + $0x1d8] sm:$0xff]
        %v1948 = vld [vmem:[#allocation11 + $0x1e0] sm:$0xff]
        %v1949 = vld [vmem:[#allocation11 + $0x1e8] sm:$0xff]
        %v1950 = vld [vmem:[#allocation11 + $0x1f0] sm:$0xff]
        %v1951 = vld [vmem:[#allocation11 + $0x1f8] sm:$0xff]
        %v1952 = vld [vmem:[%s8] sm:$0xf]
        %v1954 = vperm.slane %v1952, 0
        %v1955 = vperm.slane %v1952, 1
        %v1956 = vperm.slane %v1952, 2
        %v1957 = vperm.slane %v1952, 3
        %v2026 = vunpack.c.l.b16 %v1888
        %v2027 = vunpack.c.h.b16 %v1888
        %v2028 = vunpack.c.l.b16 %v1889
        %v2029 = vunpack.c.h.b16 %v1889
        %v2030 = vunpack.c.l.b16 %v1890
        %v2031 = vunpack.c.h.b16 %v1890
        %v2032 = vunpack.c.l.b16 %v1891
        %v2033 = vunpack.c.h.b16 %v1891
        %v2034 = vunpack.c.l.b16 %v1892
        %v2035 = vunpack.c.h.b16 %v1892
        %v2036 = vunpack.c.l.b16 %v1893
        %v2037 = vunpack.c.h.b16 %v1893
        %v2038 = vunpack.c.l.b16 %v1894
        %v2039 = vunpack.c.h.b16 %v1894
        %v2040 = vunpack.c.l.b16 %v1895
        %v2041 = vunpack.c.h.b16 %v1895
        %v2042 = vunpack.c.l.b16 %v1896
        %v2043 = vunpack.c.h.b16 %v1896
        %v2044 = vunpack.c.l.b16 %v1897
        %v2045 = vunpack.c.h.b16 %v1897
        %v2046 = vunpack.c.l.b16 %v1898
        %v2047 = vunpack.c.h.b16 %v1898
        %v2048 = vunpack.c.l.b16 %v1899
        %v2049 = vunpack.c.h.b16 %v1899
        %v2050 = vunpack.c.l.b16 %v1900
        %v2051 = vunpack.c.h.b16 %v1900
        %v2052 = vunpack.c.l.b16 %v1901
        %v2053 = vunpack.c.h.b16 %v1901
        %v2054 = vunpack.c.l.b16 %v1902
        %v2055 = vunpack.c.h.b16 %v1902
        %v2056 = vunpack.c.l.b16 %v1903
        %v2057 = vunpack.c.h.b16 %v1903
        %v2058 = vunpack.c.l.b16 %v1904
        %v2059 = vunpack.c.h.b16 %v1904
        %v2060 = vunpack.c.l.b16 %v1905
        %v2061 = vunpack.c.h.b16 %v1905
        %v2062 = vunpack.c.l.b16 %v1906
        %v2063 = vunpack.c.h.b16 %v1906
        %v2064 = vunpack.c.l.b16 %v1907
        %v2065 = vunpack.c.h.b16 %v1907
        %v2066 = vunpack.c.l.b16 %v1908
        %v2067 = vunpack.c.h.b16 %v1908
        %v2068 = vunpack.c.l.b16 %v1909
        %v2069 = vunpack.c.h.b16 %v1909
        %v2070 = vunpack.c.l.b16 %v1910
        %v2071 = vunpack.c.h.b16 %v1910
        %v2072 = vunpack.c.l.b16 %v1911
        %v2073 = vunpack.c.h.b16 %v1911
        %v2074 = vunpack.c.l.b16 %v1912
        %v2075 = vunpack.c.h.b16 %v1912
        %v2076 = vunpack.c.l.b16 %v1913
        %v2077 = vunpack.c.h.b16 %v1913
        %v2078 = vunpack.c.l.b16 %v1914
        %v2079 = vunpack.c.h.b16 %v1914
        %v2080 = vunpack.c.l.b16 %v1915
        %v2081 = vunpack.c.h.b16 %v1915
        %v2082 = vunpack.c.l.b16 %v1916
        %v2083 = vunpack.c.h.b16 %v1916
        %v2084 = vunpack.c.l.b16 %v1917
        %v2085 = vunpack.c.h.b16 %v1917
        %v2086 = vunpack.c.l.b16 %v1918
        %v2087 = vunpack.c.h.b16 %v1918
        %v2088 = vunpack.c.l.b16 %v1919
        %v2089 = vunpack.c.h.b16 %v1919
        %v2090 = vunpack.c.l.b16 %v1920
        %v2091 = vunpack.c.h.b16 %v1920
        %v2092 = vunpack.c.l.b16 %v1921
        %v2093 = vunpack.c.h.b16 %v1921
        %v2094 = vunpack.c.l.b16 %v1922
        %v2095 = vunpack.c.h.b16 %v1922
        %v2096 = vunpack.c.l.b16 %v1923
        %v2097 = vunpack.c.h.b16 %v1923
        %v2098 = vunpack.c.l.b16 %v1924
        %v2099 = vunpack.c.h.b16 %v1924
        %v2100 = vunpack.c.l.b16 %v1925
        %v2101 = vunpack.c.h.b16 %v1925
        %v2102 = vunpack.c.l.b16 %v1926
        %v2103 = vunpack.c.h.b16 %v1926
        %v2104 = vunpack.c.l.b16 %v1927
        %v2105 = vunpack.c.h.b16 %v1927
        %v2106 = vunpack.c.l.b16 %v1928
        %v2107 = vunpack.c.h.b16 %v1928
        %v2108 = vunpack.c.l.b16 %v1929
        %v2109 = vunpack.c.h.b16 %v1929
        %v2110 = vunpack.c.l.b16 %v1930
        %v2111 = vunpack.c.h.b16 %v1930
        %v2112 = vunpack.c.l.b16 %v1931
        %v2113 = vunpack.c.h.b16 %v1931
        %v2114 = vunpack.c.l.b16 %v1932
        %v2115 = vunpack.c.h.b16 %v1932
        %v2116 = vunpack.c.l.b16 %v1933
        %v2117 = vunpack.c.h.b16 %v1933
        %v2118 = vunpack.c.l.b16 %v1934
        %v2119 = vunpack.c.h.b16 %v1934
        %v2120 = vunpack.c.l.b16 %v1935
        %v2121 = vunpack.c.h.b16 %v1935
        %v2122 = vunpack.c.l.b16 %v1936
        %v2123 = vunpack.c.h.b16 %v1936
        %v2124 = vunpack.c.l.b16 %v1937
        %v2125 = vunpack.c.h.b16 %v1937
        %v2126 = vunpack.c.l.b16 %v1938
        %v2127 = vunpack.c.h.b16 %v1938
        %v2128 = vunpack.c.l.b16 %v1939
        %v2129 = vunpack.c.h.b16 %v1939
        %v2130 = vunpack.c.l.b16 %v1940
        %v2131 = vunpack.c.h.b16 %v1940
        %v2132 = vunpack.c.l.b16 %v1941
        %v2133 = vunpack.c.h.b16 %v1941
        %v2134 = vunpack.c.l.b16 %v1942
        %v2135 = vunpack.c.h.b16 %v1942
        %v2136 = vunpack.c.l.b16 %v1943
        %v2137 = vunpack.c.h.b16 %v1943
        %v2138 = vunpack.c.l.b16 %v1944
        %v2139 = vunpack.c.h.b16 %v1944
        %v2140 = vunpack.c.l.b16 %v1945
        %v2141 = vunpack.c.h.b16 %v1945
        %v2142 = vunpack.c.l.b16 %v1946
        %v2143 = vunpack.c.h.b16 %v1946
        %v2144 = vunpack.c.l.b16 %v1947
        %v2145 = vunpack.c.h.b16 %v1947
        %v2146 = vunpack.c.l.b16 %v1948
        %v2147 = vunpack.c.h.b16 %v1948
        %v2148 = vunpack.c.l.b16 %v1949
        %v2149 = vunpack.c.h.b16 %v1949
        %v2150 = vunpack.c.l.b16 %v1950
        %v2151 = vunpack.c.h.b16 %v1950
        %v2152 = vunpack.c.l.b16 %v1951
        %v2153 = vunpack.c.h.b16 %v1951
        %v2154 = vpack.c.b16 %v2030, %v2026
        %v2155 = vpack.c.b16 %v2031, %v2027
        %v2156 = vpack.c.b16 %v2032, %v2028
        %v2157 = vpack.c.b16 %v2033, %v2029
        %v2158 = vpack.c.b16 %v2038, %v2034
        %v2159 = vpack.c.b16 %v2039, %v2035
        %v2160 = vpack.c.b16 %v2040, %v2036
        %v2161 = vpack.c.b16 %v2041, %v2037
        %v2162 = vpack.c.b16 %v2046, %v2042
        %v2163 = vpack.c.b16 %v2047, %v2043
        %v2164 = vpack.c.b16 %v2048, %v2044
        %v2165 = vpack.c.b16 %v2049, %v2045
        %v2166 = vpack.c.b16 %v2054, %v2050
        %v2167 = vpack.c.b16 %v2055, %v2051
        %v2168 = vpack.c.b16 %v2056, %v2052
        %v2169 = vpack.c.b16 %v2057, %v2053
        %v2170 = vpack.c.b16 %v2062, %v2058
        %v2171 = vpack.c.b16 %v2063, %v2059
        %v2172 = vpack.c.b16 %v2064, %v2060
        %v2173 = vpack.c.b16 %v2065, %v2061
        %v2174 = vpack.c.b16 %v2070, %v2066
        %v2175 = vpack.c.b16 %v2071, %v2067
        %v2176 = vpack.c.b16 %v2072, %v2068
        %v2177 = vpack.c.b16 %v2073, %v2069
        %v2178 = vpack.c.b16 %v2078, %v2074
        %v2179 = vpack.c.b16 %v2079, %v2075
        %v2180 = vpack.c.b16 %v2080, %v2076
        %v2181 = vpack.c.b16 %v2081, %v2077
        %v2182 = vpack.c.b16 %v2086, %v2082
        %v2183 = vpack.c.b16 %v2087, %v2083
        %v2184 = vpack.c.b16 %v2088, %v2084
        %v2185 = vpack.c.b16 %v2089, %v2085
        %v2186 = vpack.c.b16 %v2094, %v2090
        %v2187 = vpack.c.b16 %v2095, %v2091
        %v2188 = vpack.c.b16 %v2096, %v2092
        %v2189 = vpack.c.b16 %v2097, %v2093
        %v2190 = vpack.c.b16 %v2102, %v2098
        %v2191 = vpack.c.b16 %v2103, %v2099
        %v2192 = vpack.c.b16 %v2104, %v2100
        %v2193 = vpack.c.b16 %v2105, %v2101
        %v2194 = vpack.c.b16 %v2110, %v2106
        %v2195 = vpack.c.b16 %v2111, %v2107
        %v2196 = vpack.c.b16 %v2112, %v2108
        %v2197 = vpack.c.b16 %v2113, %v2109
        %v2198 = vpack.c.b16 %v2118, %v2114
        %v2199 = vpack.c.b16 %v2119, %v2115
        %v2200 = vpack.c.b16 %v2120, %v2116
        %v2201 = vpack.c.b16 %v2121, %v2117
        %v2202 = vpack.c.b16 %v2126, %v2122
        %v2203 = vpack.c.b16 %v2127, %v2123
        %v2204 = vpack.c.b16 %v2128, %v2124
        %v2205 = vpack.c.b16 %v2129, %v2125
        %v2206 = vpack.c.b16 %v2134, %v2130
        %v2207 = vpack.c.b16 %v2135, %v2131
        %v2208 = vpack.c.b16 %v2136, %v2132
        %v2209 = vpack.c.b16 %v2137, %v2133
        %v2210 = vpack.c.b16 %v2142, %v2138
        %v2211 = vpack.c.b16 %v2143, %v2139
        %v2212 = vpack.c.b16 %v2144, %v2140
        %v2213 = vpack.c.b16 %v2145, %v2141
        %v2214 = vpack.c.b16 %v2150, %v2146
        %v2215 = vpack.c.b16 %v2151, %v2147
        %v2216 = vpack.c.b16 %v2152, %v2148
        %v2217 = vpack.c.b16 %v2153, %v2149
        %2282 = vmatpush.bf16.msra.mxu0 %v2182
        %2283 = vmatpush.bf16.msra.mxu0 %v2178
        %2284 = vmatpush.bf16.msra.mxu0 %v2174
        %2285 = vmatpush.bf16.msra.mxu0 %v2170
        %2286 = vmatpush.bf16.msra.mxu0 %v2166
        %2287 = vmatpush.bf16.msra.mxu0 %v2162
        %2288 = vmatpush.bf16.msra.mxu0 %v2158
        %2289 = vmatpush.bf16.msra.mxu0 %v2154
        %2290 = vmatmul.bf16.gmra.mxu0 %v1872
        %v2291 = vpop.f32.mrf.mxu0
        %v2292 = vadd.f32 %v1954, %v2291
        %v2293 = vpop.f32.mrf.mxu0
        %v2294 = vadd.f32 %v1954, %v2293
        %2295 = vmatmul.bf16.gmra.mxu0 %v1874
        %v2296 = vpop.f32.mrf.mxu0
        %v2297 = vadd.f32 %v1954, %v2296
        %v2298 = vpop.f32.mrf.mxu0
        %v2299 = vadd.f32 %v1954, %v2298
        %2300 = vmatmul.bf16.gmra.mxu0 %v1876
        %v2301 = vpop.f32.mrf.mxu0
        %v2302 = vadd.f32 %v1954, %v2301
        %v2303 = vpop.f32.mrf.mxu0
        %v2304 = vadd.f32 %v1954, %v2303
        %2305 = vmatmul.bf16.gmra.mxu0 %v1878
        %v2306 = vpop.f32.mrf.mxu0
        %v2307 = vadd.f32 %v1954, %v2306
        %v2308 = vpop.f32.mrf.mxu0
        %v2309 = vadd.f32 %v1954, %v2308
        %2310 = vmatmul.bf16.gmra.mxu0 %v1880
        %v2311 = vpop.f32.mrf.mxu0
        %v2312 = vadd.f32 %v1954, %v2311
        %v2313 = vpop.f32.mrf.mxu0
        %v2314 = vadd.f32 %v1954, %v2313
        %2315 = vmatmul.bf16.gmra.mxu0 %v1882
        %v2316 = vpop.f32.mrf.mxu0
        %v2317 = vadd.f32 %v1954, %v2316
        %v2318 = vpop.f32.mrf.mxu0
        %v2319 = vadd.f32 %v1954, %v2318
        %2320 = vmatmul.bf16.gmra.mxu0 %v1884
        %v2321 = vpop.f32.mrf.mxu0
        %v2322 = vadd.f32 %v1954, %v2321
        %v2323 = vpop.f32.mrf.mxu0
        %v2324 = vadd.f32 %v1954, %v2323
        %2325 = vmatmul.bf16.gmra.mxu0 %v1886
        %v2326 = vpop.f32.mrf.mxu0
        %v2327 = vadd.f32 %v1954, %v2326
        %v2328 = vpop.f32.mrf.mxu0
        %v2329 = vadd.f32 %v1954, %v2328
        %2330 = vdwg.mxu0
        %2331 = vmatpush.bf16.msra.mxu0 %v2214
        %2332 = vmatpush.bf16.msra.mxu0 %v2210
        %2333 = vmatpush.bf16.msra.mxu0 %v2206
        %2334 = vmatpush.bf16.msra.mxu0 %v2202
        %2335 = vmatpush.bf16.msra.mxu0 %v2198
        %2336 = vmatpush.bf16.msra.mxu0 %v2194
        %2337 = vmatpush.bf16.msra.mxu0 %v2190
        %2338 = vmatpush.bf16.msra.mxu0 %v2186
        %2339 = vmatmul.bf16.gmra.mxu0 %v1873
        %v2340 = vpop.f32.mrf.mxu0
        %v2341 = vadd.f32 %v2292, %v2340
        %v2342 = vpop.f32.mrf.mxu0
        %v2343 = vadd.f32 %v2294, %v2342
        %2344 = vmatmul.bf16.gmra.mxu0 %v1875
        %v2345 = vpop.f32.mrf.mxu0
        %v2346 = vadd.f32 %v2297, %v2345
        %v2347 = vpop.f32.mrf.mxu0
        %v2348 = vadd.f32 %v2299, %v2347
        %2349 = vmatmul.bf16.gmra.mxu0 %v1877
        %v2350 = vpop.f32.mrf.mxu0
        %v2351 = vadd.f32 %v2302, %v2350
        %v2352 = vpop.f32.mrf.mxu0
        %v2353 = vadd.f32 %v2304, %v2352
        %2354 = vmatmul.bf16.gmra.mxu0 %v1879
        %v2355 = vpop.f32.mrf.mxu0
        %v2356 = vadd.f32 %v2307, %v2355
        %v2357 = vpop.f32.mrf.mxu0
        %v2358 = vadd.f32 %v2309, %v2357
        %2359 = vmatmul.bf16.gmra.mxu0 %v1881
        %v2360 = vpop.f32.mrf.mxu0
        %v2361 = vadd.f32 %v2312, %v2360
        %v2362 = vpop.f32.mrf.mxu0
        %v2363 = vadd.f32 %v2314, %v2362
        %2364 = vmatmul.bf16.gmra.mxu0 %v1883
        %v2365 = vpop.f32.mrf.mxu0
        %v2366 = vadd.f32 %v2317, %v2365
        %v2367 = vpop.f32.mrf.mxu0
        %v2368 = vadd.f32 %v2319, %v2367
        %2369 = vmatmul.bf16.gmra.mxu0 %v1885
        %v2370 = vpop.f32.mrf.mxu0
        %v2371 = vadd.f32 %v2322, %v2370
        %v2372 = vpop.f32.mrf.mxu0
        %v2373 = vadd.f32 %v2324, %v2372
        %2374 = vmatmul.bf16.gmra.mxu0 %v1887
        %v2375 = vpop.f32.mrf.mxu0
        %v2376 = vadd.f32 %v2327, %v2375
        %v2377 = vpop.f32.mrf.mxu0
        %v2378 = vadd.f32 %v2329, %v2377
        %2379 = vdwg.mxu0
        %2380 = vmatpush.bf16.msra.mxu0 %v2183
        %2381 = vmatpush.bf16.msra.mxu0 %v2179
        %2382 = vmatpush.bf16.msra.mxu0 %v2175
        %2383 = vmatpush.bf16.msra.mxu0 %v2171
        %2384 = vmatpush.bf16.msra.mxu0 %v2167
        %2385 = vmatpush.bf16.msra.mxu0 %v2163
        %2386 = vmatpush.bf16.msra.mxu0 %v2159
        %2387 = vmatpush.bf16.msra.mxu0 %v2155
        %2388 = vmatmul.bf16.gmra.mxu0 %v1872
        %v2389 = vpop.f32.mrf.mxu0
        %v2390 = vadd.f32 %v1955, %v2389
        %v2391 = vpop.f32.mrf.mxu0
        %v2392 = vadd.f32 %v1955, %v2391
        %2393 = vmatmul.bf16.gmra.mxu0 %v1874
        %v2394 = vpop.f32.mrf.mxu0
        %v2395 = vadd.f32 %v1955, %v2394
        %v2396 = vpop.f32.mrf.mxu0
        %v2397 = vadd.f32 %v1955, %v2396
        %2398 = vmatmul.bf16.gmra.mxu0 %v1876
        %v2399 = vpop.f32.mrf.mxu0
        %v2400 = vadd.f32 %v1955, %v2399
        %v2401 = vpop.f32.mrf.mxu0
        %v2402 = vadd.f32 %v1955, %v2401
        %2403 = vmatmul.bf16.gmra.mxu0 %v1878
        %v2404 = vpop.f32.mrf.mxu0
        %v2405 = vadd.f32 %v1955, %v2404
        %v2406 = vpop.f32.mrf.mxu0
        %v2407 = vadd.f32 %v1955, %v2406
        %2408 = vmatmul.bf16.gmra.mxu0 %v1880
        %v2409 = vpop.f32.mrf.mxu0
        %v2410 = vadd.f32 %v1955, %v2409
        %v2411 = vpop.f32.mrf.mxu0
        %v2412 = vadd.f32 %v1955, %v2411
        %2413 = vmatmul.bf16.gmra.mxu0 %v1882
        %v2414 = vpop.f32.mrf.mxu0
        %v2415 = vadd.f32 %v1955, %v2414
        %v2416 = vpop.f32.mrf.mxu0
        %v2417 = vadd.f32 %v1955, %v2416
        %2418 = vmatmul.bf16.gmra.mxu0 %v1884
        %v2419 = vpop.f32.mrf.mxu0
        %v2420 = vadd.f32 %v1955, %v2419
        %v2421 = vpop.f32.mrf.mxu0
        %v2422 = vadd.f32 %v1955, %v2421
        %2423 = vmatmul.bf16.gmra.mxu0 %v1886
        %v2424 = vpop.f32.mrf.mxu0
        %v2425 = vadd.f32 %v1955, %v2424
        %v2426 = vpop.f32.mrf.mxu0
        %v2427 = vadd.f32 %v1955, %v2426
        %2428 = vdwg.mxu0
        %2429 = vmatpush.bf16.msra.mxu0 %v2215
        %2430 = vmatpush.bf16.msra.mxu0 %v2211
        %2431 = vmatpush.bf16.msra.mxu0 %v2207
        %2432 = vmatpush.bf16.msra.mxu0 %v2203
        %2433 = vmatpush.bf16.msra.mxu0 %v2199
        %2434 = vmatpush.bf16.msra.mxu0 %v2195
        %2435 = vmatpush.bf16.msra.mxu0 %v2191
        %2436 = vmatpush.bf16.msra.mxu0 %v2187
        %2437 = vmatmul.bf16.gmra.mxu0 %v1873
        %v2438 = vpop.f32.mrf.mxu0
        %v2439 = vadd.f32 %v2390, %v2438
        %v2440 = vpop.f32.mrf.mxu0
        %v2441 = vadd.f32 %v2392, %v2440
        %2442 = vmatmul.bf16.gmra.mxu0 %v1875
        %v2443 = vpop.f32.mrf.mxu0
        %v2444 = vadd.f32 %v2395, %v2443
        %v2445 = vpop.f32.mrf.mxu0
        %v2446 = vadd.f32 %v2397, %v2445
        %2447 = vmatmul.bf16.gmra.mxu0 %v1877
        %v2448 = vpop.f32.mrf.mxu0
        %v2449 = vadd.f32 %v2400, %v2448
        %v2450 = vpop.f32.mrf.mxu0
        %v2451 = vadd.f32 %v2402, %v2450
        %2452 = vmatmul.bf16.gmra.mxu0 %v1879
        %v2453 = vpop.f32.mrf.mxu0
        %v2454 = vadd.f32 %v2405, %v2453
        %v2455 = vpop.f32.mrf.mxu0
        %v2456 = vadd.f32 %v2407, %v2455
        %2457 = vmatmul.bf16.gmra.mxu0 %v1881
        %v2458 = vpop.f32.mrf.mxu0
        %v2459 = vadd.f32 %v2410, %v2458
        %v2460 = vpop.f32.mrf.mxu0
        %v2461 = vadd.f32 %v2412, %v2460
        %2462 = vmatmul.bf16.gmra.mxu0 %v1883
        %v2463 = vpop.f32.mrf.mxu0
        %v2464 = vadd.f32 %v2415, %v2463
        %v2465 = vpop.f32.mrf.mxu0
        %v2466 = vadd.f32 %v2417, %v2465
        %2467 = vmatmul.bf16.gmra.mxu0 %v1885
        %v2468 = vpop.f32.mrf.mxu0
        %v2469 = vadd.f32 %v2420, %v2468
        %v2470 = vpop.f32.mrf.mxu0
        %v2471 = vadd.f32 %v2422, %v2470
        %2472 = vmatmul.bf16.gmra.mxu0 %v1887
        %v2473 = vpop.f32.mrf.mxu0
        %v2474 = vadd.f32 %v2425, %v2473
        %v2475 = vpop.f32.mrf.mxu0
        %v2476 = vadd.f32 %v2427, %v2475
        %2477 = vdwg.mxu0
        %2478 = vmatpush.bf16.msra.mxu0 %v2184
        %2479 = vmatpush.bf16.msra.mxu0 %v2180
        %2480 = vmatpush.bf16.msra.mxu0 %v2176
        %2481 = vmatpush.bf16.msra.mxu0 %v2172
        %2482 = vmatpush.bf16.msra.mxu0 %v2168
        %2483 = vmatpush.bf16.msra.mxu0 %v2164
        %2484 = vmatpush.bf16.msra.mxu0 %v2160
        %2485 = vmatpush.bf16.msra.mxu0 %v2156
        %2486 = vmatmul.bf16.gmra.mxu0 %v1872
        %v2487 = vpop.f32.mrf.mxu0
        %v2488 = vadd.f32 %v1956, %v2487
        %v2489 = vpop.f32.mrf.mxu0
        %v2490 = vadd.f32 %v1956, %v2489
        %2491 = vmatmul.bf16.gmra.mxu0 %v1874
        %v2492 = vpop.f32.mrf.mxu0
        %v2493 = vadd.f32 %v1956, %v2492
        %v2494 = vpop.f32.mrf.mxu0
        %v2495 = vadd.f32 %v1956, %v2494
        %2496 = vmatmul.bf16.gmra.mxu0 %v1876
        %v2497 = vpop.f32.mrf.mxu0
        %v2498 = vadd.f32 %v1956, %v2497
        %v2499 = vpop.f32.mrf.mxu0
        %v2500 = vadd.f32 %v1956, %v2499
        %2501 = vmatmul.bf16.gmra.mxu0 %v1878
        %v2502 = vpop.f32.mrf.mxu0
        %v2503 = vadd.f32 %v1956, %v2502
        %v2504 = vpop.f32.mrf.mxu0
        %v2505 = vadd.f32 %v1956, %v2504
        %2506 = vmatmul.bf16.gmra.mxu0 %v1880
        %v2507 = vpop.f32.mrf.mxu0
        %v2508 = vadd.f32 %v1956, %v2507
        %v2509 = vpop.f32.mrf.mxu0
        %v2510 = vadd.f32 %v1956, %v2509
        %2511 = vmatmul.bf16.gmra.mxu0 %v1882
        %v2512 = vpop.f32.mrf.mxu0
        %v2513 = vadd.f32 %v1956, %v2512
        %v2514 = vpop.f32.mrf.mxu0
        %v2515 = vadd.f32 %v1956, %v2514
        %2516 = vmatmul.bf16.gmra.mxu0 %v1884
        %v2517 = vpop.f32.mrf.mxu0
        %v2518 = vadd.f32 %v1956, %v2517
        %v2519 = vpop.f32.mrf.mxu0
        %v2520 = vadd.f32 %v1956, %v2519
        %2521 = vmatmul.bf16.gmra.mxu0 %v1886
        %v2522 = vpop.f32.mrf.mxu0
        %v2523 = vadd.f32 %v1956, %v2522
        %v2524 = vpop.f32.mrf.mxu0
        %v2525 = vadd.f32 %v1956, %v2524
        %2526 = vdwg.mxu0
        %2527 = vmatpush.bf16.msra.mxu0 %v2216
        %2528 = vmatpush.bf16.msra.mxu0 %v2212
        %2529 = vmatpush.bf16.msra.mxu0 %v2208
        %2530 = vmatpush.bf16.msra.mxu0 %v2204
        %2531 = vmatpush.bf16.msra.mxu0 %v2200
        %2532 = vmatpush.bf16.msra.mxu0 %v2196
        %2533 = vmatpush.bf16.msra.mxu0 %v2192
        %2534 = vmatpush.bf16.msra.mxu0 %v2188
        %2535 = vmatmul.bf16.gmra.mxu0 %v1873
        %v2536 = vpop.f32.mrf.mxu0
        %v2537 = vadd.f32 %v2488, %v2536
        %v2538 = vpop.f32.mrf.mxu0
        %v2539 = vadd.f32 %v2490, %v2538
        %2540 = vmatmul.bf16.gmra.mxu0 %v1875
        %v2541 = vpop.f32.mrf.mxu0
        %v2542 = vadd.f32 %v2493, %v2541
        %v2543 = vpop.f32.mrf.mxu0
        %v2544 = vadd.f32 %v2495, %v2543
        %2545 = vmatmul.bf16.gmra.mxu0 %v1877
        %v2546 = vpop.f32.mrf.mxu0
        %v2547 = vadd.f32 %v2498, %v2546
        %v2548 = vpop.f32.mrf.mxu0
        %v2549 = vadd.f32 %v2500, %v2548
        %2550 = vmatmul.bf16.gmra.mxu0 %v1879
        %v2551 = vpop.f32.mrf.mxu0
        %v2552 = vadd.f32 %v2503, %v2551
        %v2553 = vpop.f32.mrf.mxu0
        %v2554 = vadd.f32 %v2505, %v2553
        %2555 = vmatmul.bf16.gmra.mxu0 %v1881
        %v2556 = vpop.f32.mrf.mxu0
        %v2557 = vadd.f32 %v2508, %v2556
        %v2558 = vpop.f32.mrf.mxu0
        %v2559 = vadd.f32 %v2510, %v2558
        %2560 = vmatmul.bf16.gmra.mxu0 %v1883
        %v2561 = vpop.f32.mrf.mxu0
        %v2562 = vadd.f32 %v2513, %v2561
        %v2563 = vpop.f32.mrf.mxu0
        %v2564 = vadd.f32 %v2515, %v2563
        %2565 = vmatmul.bf16.gmra.mxu0 %v1885
        %v2566 = vpop.f32.mrf.mxu0
        %v2567 = vadd.f32 %v2518, %v2566
        %v2568 = vpop.f32.mrf.mxu0
        %v2569 = vadd.f32 %v2520, %v2568
        %2570 = vmatmul.bf16.gmra.mxu0 %v1887
        %v2571 = vpop.f32.mrf.mxu0
        %v2572 = vadd.f32 %v2523, %v2571
        %v2573 = vpop.f32.mrf.mxu0
        %v2574 = vadd.f32 %v2525, %v2573
        %2575 = vdwg.mxu0
        %2576 = vmatpush.bf16.msra.mxu0 %v2185
        %2577 = vmatpush.bf16.msra.mxu0 %v2181
        %2578 = vmatpush.bf16.msra.mxu0 %v2177
        %2579 = vmatpush.bf16.msra.mxu0 %v2173
        %2580 = vmatpush.bf16.msra.mxu0 %v2169
        %2581 = vmatpush.bf16.msra.mxu0 %v2165
        %2582 = vmatpush.bf16.msra.mxu0 %v2161
        %2583 = vmatpush.bf16.msra.mxu0 %v2157
        %2584 = vmatmul.bf16.gmra.mxu0 %v1872
        %v2585 = vpop.f32.mrf.mxu0
        %v2586 = vadd.f32 %v1957, %v2585
        %v2587 = vpop.f32.mrf.mxu0
        %v2588 = vadd.f32 %v1957, %v2587
        %2589 = vmatmul.bf16.gmra.mxu0 %v1874
        %v2590 = vpop.f32.mrf.mxu0
        %v2591 = vadd.f32 %v1957, %v2590
        %v2592 = vpop.f32.mrf.mxu0
        %v2593 = vadd.f32 %v1957, %v2592
        %2594 = vmatmul.bf16.gmra.mxu0 %v1876
        %v2595 = vpop.f32.mrf.mxu0
        %v2596 = vadd.f32 %v1957, %v2595
        %v2597 = vpop.f32.mrf.mxu0
        %v2598 = vadd.f32 %v1957, %v2597
        %2599 = vmatmul.bf16.gmra.mxu0 %v1878
        %v2600 = vpop.f32.mrf.mxu0
        %v2601 = vadd.f32 %v1957, %v2600
        %v2602 = vpop.f32.mrf.mxu0
        %v2603 = vadd.f32 %v1957, %v2602
        %2604 = vmatmul.bf16.gmra.mxu0 %v1880
        %v2605 = vpop.f32.mrf.mxu0
        %v2606 = vadd.f32 %v1957, %v2605
        %v2607 = vpop.f32.mrf.mxu0
        %v2608 = vadd.f32 %v1957, %v2607
        %2609 = vmatmul.bf16.gmra.mxu0 %v1882
        %v2610 = vpop.f32.mrf.mxu0
        %v2611 = vadd.f32 %v1957, %v2610
        %v2612 = vpop.f32.mrf.mxu0
        %v2613 = vadd.f32 %v1957, %v2612
        %2614 = vmatmul.bf16.gmra.mxu0 %v1884
        %v2615 = vpop.f32.mrf.mxu0
        %v2616 = vadd.f32 %v1957, %v2615
        %v2617 = vpop.f32.mrf.mxu0
        %v2618 = vadd.f32 %v1957, %v2617
        %2619 = vmatmul.bf16.gmra.mxu0 %v1886
        %v2620 = vpop.f32.mrf.mxu0
        %v2621 = vadd.f32 %v1957, %v2620
        %v2622 = vpop.f32.mrf.mxu0
        %v2623 = vadd.f32 %v1957, %v2622
        %2624 = vdwg.mxu0
        %2625 = vmatpush.bf16.msra.mxu0 %v2217
        %2626 = vmatpush.bf16.msra.mxu0 %v2213
        %2627 = vmatpush.bf16.msra.mxu0 %v2209
        %2628 = vmatpush.bf16.msra.mxu0 %v2205
        %2629 = vmatpush.bf16.msra.mxu0 %v2201
        %2630 = vmatpush.bf16.msra.mxu0 %v2197
        %2631 = vmatpush.bf16.msra.mxu0 %v2193
        %2632 = vmatpush.bf16.msra.mxu0 %v2189
        %2633 = vmatmul.bf16.gmra.mxu0 %v1873
        %v2634 = vpop.f32.mrf.mxu0
        %v2635 = vadd.f32 %v2586, %v2634
        %v2636 = vpop.f32.mrf.mxu0
        %v2637 = vadd.f32 %v2588, %v2636
        %2638 = vmatmul.bf16.gmra.mxu0 %v1875
        %v2639 = vpop.f32.mrf.mxu0
        %v2640 = vadd.f32 %v2591, %v2639
        %v2641 = vpop.f32.mrf.mxu0
        %v2642 = vadd.f32 %v2593, %v2641
        %2643 = vmatmul.bf16.gmra.mxu0 %v1877
        %v2644 = vpop.f32.mrf.mxu0
        %v2645 = vadd.f32 %v2596, %v2644
        %v2646 = vpop.f32.mrf.mxu0
        %v2647 = vadd.f32 %v2598, %v2646
        %2648 = vmatmul.bf16.gmra.mxu0 %v1879
        %v2649 = vpop.f32.mrf.mxu0
        %v2650 = vadd.f32 %v2601, %v2649
        %v2651 = vpop.f32.mrf.mxu0
        %v2652 = vadd.f32 %v2603, %v2651
        %2653 = vmatmul.bf16.gmra.mxu0 %v1881
        %v2654 = vpop.f32.mrf.mxu0
        %v2655 = vadd.f32 %v2606, %v2654
        %v2656 = vpop.f32.mrf.mxu0
        %v2657 = vadd.f32 %v2608, %v2656
        %2658 = vmatmul.bf16.gmra.mxu0 %v1883
        %v2659 = vpop.f32.mrf.mxu0
        %v2660 = vadd.f32 %v2611, %v2659
        %v2661 = vpop.f32.mrf.mxu0
        %v2662 = vadd.f32 %v2613, %v2661
        %2663 = vmatmul.bf16.gmra.mxu0 %v1885
        %v2664 = vpop.f32.mrf.mxu0
        %v2665 = vadd.f32 %v2616, %v2664
        %v2666 = vpop.f32.mrf.mxu0
        %v2667 = vadd.f32 %v2618, %v2666
        %2668 = vmatmul.bf16.gmra.mxu0 %v1887
        %v2669 = vpop.f32.mrf.mxu0
        %v2670 = vadd.f32 %v2621, %v2669
        %v2671 = vpop.f32.mrf.mxu0
        %v2672 = vadd.f32 %v2623, %v2671
        %2673 = vdwg.mxu0
        %2674 = vst [vmem:[%s465] sm:$0xff] %v1593
        %2675 = vst [vmem:[%s465 + $0x8] sm:$0xff] %v1595
        %2676 = vst [vmem:[%s465 + $0x10] sm:$0xff] %v1598
        %2677 = vst [vmem:[%s465 + $0x18] sm:$0xff] %v1600
        %2678 = vst [vmem:[%s465 + $0x20] sm:$0xff] %v1603
        %2679 = vst [vmem:[%s465 + $0x28] sm:$0xff] %v1605
        %2680 = vst [vmem:[%s465 + $0x30] sm:$0xff] %v1608
        %2681 = vst [vmem:[%s465 + $0x38] sm:$0xff] %v1610
        %2682 = vst [vmem:[%s465 + $0x40] sm:$0xff] %v1613
        %2683 = vst [vmem:[%s465 + $0x48] sm:$0xff] %v1615
        %2684 = vst [vmem:[%s465 + $0x50] sm:$0xff] %v1618
        %2685 = vst [vmem:[%s465 + $0x58] sm:$0xff] %v1620
        %2686 = vst [vmem:[%s465 + $0x60] sm:$0xff] %v1623
        %2687 = vst [vmem:[%s465 + $0x68] sm:$0xff] %v1625
        %2688 = vst [vmem:[%s465 + $0x70] sm:$0xff] %v1628
        %2689 = vst [vmem:[%s465 + $0x78] sm:$0xff] %v1630
        %2690 = vst [vmem:[%s472] sm:$0xff] %v2341
        %2691 = vst [vmem:[%s472 + $0x8] sm:$0xff] %v2439
        %2692 = vst [vmem:[%s472 + $0x10] sm:$0xff] %v2537
        %2693 = vst [vmem:[%s472 + $0x18] sm:$0xff] %v2635
        %2694 = vst [vmem:[%s472 + $0x20] sm:$0xff] %v2343
        %2695 = vst [vmem:[%s472 + $0x28] sm:$0xff] %v2441
        %2696 = vst [vmem:[%s472 + $0x30] sm:$0xff] %v2539
        %2697 = vst [vmem:[%s472 + $0x38] sm:$0xff] %v2637
        %2698 = vst [vmem:[%s472 + $0x40] sm:$0xff] %v2346
        %2699 = vst [vmem:[%s472 + $0x48] sm:$0xff] %v2444
        %2700 = vst [vmem:[%s472 + $0x50] sm:$0xff] %v2542
        %2701 = vst [vmem:[%s472 + $0x58] sm:$0xff] %v2640
        %2702 = vst [vmem:[%s472 + $0x60] sm:$0xff] %v2348
        %2703 = vst [vmem:[%s472 + $0x68] sm:$0xff] %v2446
        %2704 = vst [vmem:[%s472 + $0x70] sm:$0xff] %v2544
        %2705 = vst [vmem:[%s472 + $0x78] sm:$0xff] %v2642
        %2706 = vst [vmem:[%s472 + $0x80] sm:$0xff] %v2351
        %2707 = vst [vmem:[%s472 + $0x88] sm:$0xff] %v2449
        %2708 = vst [vmem:[%s472 + $0x90] sm:$0xff] %v2547
        %2709 = vst [vmem:[%s472 + $0x98] sm:$0xff] %v2645
        %2710 = vst [vmem:[%s472 + $0xa0] sm:$0xff] %v2353
        %2711 = vst [vmem:[%s472 + $0xa8] sm:$0xff] %v2451
        %2712 = vst [vmem:[%s472 + $0xb0] sm:$0xff] %v2549
        %2713 = vst [vmem:[%s472 + $0xb8] sm:$0xff] %v2647
        %2714 = vst [vmem:[%s472 + $0xc0] sm:$0xff] %v2356
        %2715 = vst [vmem:[%s472 + $0xc8] sm:$0xff] %v2454
        %2716 = vst [vmem:[%s472 + $0xd0] sm:$0xff] %v2552
        %2717 = vst [vmem:[%s472 + $0xd8] sm:$0xff] %v2650
        %2718 = vst [vmem:[%s472 + $0xe0] sm:$0xff] %v2358
        %2719 = vst [vmem:[%s472 + $0xe8] sm:$0xff] %v2456
        %2720 = vst [vmem:[%s472 + $0xf0] sm:$0xff] %v2554
        %2721 = vst [vmem:[%s472 + $0xf8] sm:$0xff] %v2652
        %2722 = vst [vmem:[%s472 + $0x100] sm:$0xff] %v2361
        %2723 = vst [vmem:[%s472 + $0x108] sm:$0xff] %v2459
        %2724 = vst [vmem:[%s472 + $0x110] sm:$0xff] %v2557
        %2725 = vst [vmem:[%s472 + $0x118] sm:$0xff] %v2655
        %2726 = vst [vmem:[%s472 + $0x120] sm:$0xff] %v2363
        %2727 = vst [vmem:[%s472 + $0x128] sm:$0xff] %v2461
        %2728 = vst [vmem:[%s472 + $0x130] sm:$0xff] %v2559
        %2729 = vst [vmem:[%s472 + $0x138] sm:$0xff] %v2657
        %2730 = vst [vmem:[%s472 + $0x140] sm:$0xff] %v2366
        %2731 = vst [vmem:[%s472 + $0x148] sm:$0xff] %v2464
        %2732 = vst [vmem:[%s472 + $0x150] sm:$0xff] %v2562
        %2733 = vst [vmem:[%s472 + $0x158] sm:$0xff] %v2660
        %2734 = vst [vmem:[%s472 + $0x160] sm:$0xff] %v2368
        %2735 = vst [vmem:[%s472 + $0x168] sm:$0xff] %v2466
        %2736 = vst [vmem:[%s472 + $0x170] sm:$0xff] %v2564
        %2737 = vst [vmem:[%s472 + $0x178] sm:$0xff] %v2662
        %2738 = vst [vmem:[%s472 + $0x180] sm:$0xff] %v2371
        %2739 = vst [vmem:[%s472 + $0x188] sm:$0xff] %v2469
        %2740 = vst [vmem:[%s472 + $0x190] sm:$0xff] %v2567
        %2741 = vst [vmem:[%s472 + $0x198] sm:$0xff] %v2665
        %2742 = vst [vmem:[%s472 + $0x1a0] sm:$0xff] %v2373
        %2743 = vst [vmem:[%s472 + $0x1a8] sm:$0xff] %v2471
        %2744 = vst [vmem:[%s472 + $0x1b0] sm:$0xff] %v2569
        %2745 = vst [vmem:[%s472 + $0x1b8] sm:$0xff] %v2667
        %2746 = vst [vmem:[%s472 + $0x1c0] sm:$0xff] %v2376
        %2747 = vst [vmem:[%s472 + $0x1c8] sm:$0xff] %v2474
        %2748 = vst [vmem:[%s472 + $0x1d0] sm:$0xff] %v2572
        %2749 = vst [vmem:[%s472 + $0x1d8] sm:$0xff] %v2670
        %2750 = vst [vmem:[%s472 + $0x1e0] sm:$0xff] %v2378
        %2751 = vst [vmem:[%s472 + $0x1e8] sm:$0xff] %v2476
        %2752 = vst [vmem:[%s472 + $0x1f0] sm:$0xff] %v2574
        %2753 = vst [vmem:[%s472 + $0x1f8] sm:$0xff] %v2672
        %s2754 = sand.u32 %s236, 1
        %s2755 = scalar_lea.sflag [#allocation4], %s2754
        %s2756 = sand.u32 %s236, 1
        %s2757 = smul.addr %s2756, 128
        %s2758 = scalar_lea.vmem [#allocation13], %s2757
        %s2759 = sand.u32 %s262, 1
        %s2760 = scalar_lea.sflag [#allocation15], %s2759
        %s2761 = sand.u32 %s262, 1
        %s2762 = smul.addr %s2761, 512
        %s2763 = scalar_lea.vmem [#allocation14], %s2762
        // Predicated region
        $region81: #{tpu_custom_call.1} parent=55 // pred_check
          %p2764 = pneg %p246
        $region82: #{tpu_custom_call.1} parent=55 // pred_check_branch
          %2766 = sbr.rel (%p2764) target = $region84
        $region83: #{tpu_custom_call.1} parent=55 // pred_region
          %s2767 = smul.u32 16, %s34
          %2769 = vsyncadd %s2755, 0
          %s2770 = smul.addr %s2767, 8
          %s2771 = scalar_lea.hbm %s9, %s2770
          %s2772 = sshll.u32 %s2758, 4
          %s2773 = int_to_ptr.vmem [resolvable:$true] %s2772
          %s2774 = sshll.u32 %s2771, 4
          %s2775 = int_to_ptr.hbm [resolvable:$true] %s2774
          %2780 = dma.vmem_to_hbm [thread:$0]  %s2773, 2048, %s2775, %s2755, 128, 128, 8
        $region84: #{tpu_custom_call.1} parent=55 // pred_fallthru
          _
        // Predicated region
        $region85: #{tpu_custom_call.1} parent=55 // pred_check
          %p2781 = pneg %p272
        $region86: #{tpu_custom_call.1} parent=55 // pred_check_branch
          %2783 = sbr.rel (%p2781) target = $region88
        $region87: #{tpu_custom_call.1} parent=55 // pred_region
          %s2784 = smul.u32 16, %s34
          %2786 = vsyncadd %s2760, 0
          %s2787 = smul.addr %s2784, 4
          %s2788 = smul.addr %s2787, 8
          %s2789 = scalar_lea.hbm %s10, %s2788
          %s2790 = sshll.u32 %s2763, 4
          %s2791 = int_to_ptr.vmem [resolvable:$true] %s2790
          %s2792 = sshll.u32 %s2789, 4
          %s2793 = int_to_ptr.hbm [resolvable:$true] %s2792
          %2798 = dma.vmem_to_hbm [thread:$0]  %s2791, 8192, %s2793, %s2760, 512, 512, 32
        $region88: #{tpu_custom_call.1} parent=55 // pred_fallthru
          _
      $region56: #{tpu_custom_call.1} parent=5 // pred_fallthru
        _
      %p2799 = scmp.le.s32.totalorder 2, %s29
      // Predicated region
      $region89: #{tpu_custom_call.1} parent=5 // pred_check
        %p2800 = pneg %p2799
      $region90: #{tpu_custom_call.1} parent=5 // pred_check_branch
        %2802 = sbr.rel (%p2800) target = $region92
      $region91: #{tpu_custom_call.1} parent=5 // pred_region
        %s2803 = ssub.s32 %s29, 2
        // Predicated region
        $region93: #{tpu_custom_call.1} parent=91 // pred_check
          %p2804 = pneg %p252
        $region94: #{tpu_custom_call.1} parent=91 // pred_check_branch
          %2806 = sbr.rel (%p2804) target = $region96
        $region95: #{tpu_custom_call.1} parent=91 // pred_region
          %s2807 = sand.u32 %s237, 1
          %s2808 = scalar_lea.sflag [#allocation4], %s2807
          %s2809 = sand.u32 %s237, 1
          %s2810 = smul.addr %s2809, 128
          %s2811 = scalar_lea.vmem [#allocation13], %s2810
          %2813 = dma.done %s2808, 2048
        $region96: #{tpu_custom_call.1} parent=91 // pred_fallthru
          _
        // Predicated region
        $region97: #{tpu_custom_call.1} parent=91 // pred_check
          %p2814 = pneg %p278
        $region98: #{tpu_custom_call.1} parent=91 // pred_check_branch
          %2816 = sbr.rel (%p2814) target = $region100
        $region99: #{tpu_custom_call.1} parent=91 // pred_region
          %s2817 = sand.u32 %s263, 1
          %s2818 = scalar_lea.sflag [#allocation15], %s2817
          %s2819 = sand.u32 %s263, 1
          %s2820 = smul.addr %s2819, 512
          %s2821 = scalar_lea.vmem [#allocation14], %s2820
          %2823 = dma.done %s2818, 8192
        $region100: #{tpu_custom_call.1} parent=91 // pred_fallthru
          _
      $region92: #{tpu_custom_call.1} parent=5 // pred_fallthru
        _
    $region6: #{tpu_custom_call.1} parent=1 // loop_footer
      %s33 = sadd.s32 1, %s29
    $region7: #{tpu_custom_call.1} parent=1 // loop_footer_branch
      %28 = sbr.rel target = $region3
    $region8: #{tpu_custom_call.1} parent=1 // loop_exit
      _
    %2824 = vsyncpa [#allocation3], 1
    %s2825 = scalar_lea.sflag [#allocation3], 1
    %2826 = vsyncpa %s2825, 1
    %2827 = vsyncpa [#allocation6], 1
    %2828 = vsyncpa [#allocation9], 1
    %2829 = vsyncpa [#allocation12], 1
    %2830 = vsyncpa [#allocation4], 1
    %s2831 = scalar_lea.sflag [#allocation4], 1
    %2832 = vsyncpa %s2831, 1
    %2833 = vsyncpa [#allocation15], 1
    %s2834 = scalar_lea.sflag [#allocation15], 1
    %2835 = vsyncpa %s2834, 1

</llo_original>
